<compile_context>
chip_gen: v6e
topology: v6e:2x2x1
jax: 0.10.0
libtpu: 0.0.40
codegen_flags: <defaults>
</compile_context>

<pallas_src>
import functools

import numpy as np
import jax
import jax.numpy as jnp
from jax.experimental import pallas as pl
from jax.experimental.pallas import tpu as pltpu

_LANE = 128


def _round_up(x: int, m: int) -> int:
    return ((x + m - 1) // m) * m


@functools.lru_cache(maxsize=None)
def _pil_bilinear_matrix(in_size: int, out_size: int) -> np.ndarray:
    """Interpolation matrix M (out_size, in_size) matching PIL's antialiased
    bilinear (triangle) filter: out = M @ in."""
    scale = in_size / out_size
    filterscale = max(scale, 1.0)
    support = 1.0 * filterscale  # bilinear filter support = 1
    mat = np.zeros((out_size, in_size), dtype=np.float32)
    for i in range(out_size):
        center = (i + 0.5) * scale
        xmin = max(int(center - support + 0.5), 0)
        xmax = min(int(center + support + 0.5), in_size)
        xs = np.arange(xmin, xmax, dtype=np.float64)
        w = np.maximum(0.0, 1.0 - np.abs((xs - center + 0.5) / filterscale))
        s = w.sum()
        if s > 0:
            w = w / s
        mat[i, xmin:xmax] = w.astype(np.float32)
    return mat


@functools.lru_cache(maxsize=None)
def _resize_weights(h1: int, w1: int, h2: int, w2: int,
                    h1p: int, w2p: int, dtype_name: str):
    """Cached device weights: Wh (h2, h1p) with zero columns for the h1
    padding, and Wwt (w1, w2p) zero-padded to a lane-dense output width."""
    dtype = jnp.dtype(dtype_name)
    wh = np.zeros((h2, h1p), dtype=np.float32)
    wh[:, :h1] = _pil_bilinear_matrix(h1, h2)
    wwt = np.zeros((w1, w2p), dtype=np.float32)
    wwt[:, :w2] = _pil_bilinear_matrix(w1, w2).T
    return jnp.asarray(wh, dtype=dtype), jnp.asarray(wwt, dtype=dtype)


def _resize_kernel(wwt_ref, wh_ref, x_ref, o_ref):
    # wwt_ref: (w1, w2p)     transposed, zero-padded column-resize matrix
    # wh_ref : (h2, h1p)     row-resize matrix (zero cols for h1 padding)
    # x_ref  : (bb, h1p, w1) block of fused (n, c) images, input dtype
    # o_ref  : (bb, h2, w2p) lane-dense output block, compute dtype
    h2, h1p = wh_ref.shape
    bb, _, w1 = x_ref.shape
    w2p = wwt_ref.shape[1]
    cdt = wh_ref.dtype

    # Cast in VMEM after the DMA (review item 7); no-op for the f32 path.
    x = x_ref[...].astype(cdt)

    # 1) Width resize: one large lane-dense GEMM on the MXU.
    #    (bb*h1p, w1) @ (w1, w2p) -> (bb*h1p, w2p).  h1p % sublane == 0, so
    #    the reshape is a layout no-op (review item 10).
    tmp = jnp.dot(x.reshape(bb * h1p, w1), wwt_ref[...],
                  preferred_element_type=jnp.float32,
                  precision=jax.lax.Precision.HIGHEST)
    tmp = tmp.astype(cdt)

    # 2) Height resize as ONE stationary-Wh GEMM (review item 1):
    #    relayout (bb, h1p, w2p) -> (h1p, bb*w2p); the lane dim is untouched
    #    and w2p % 128 == 0, so the merge is tile-aligned.
    tmp = tmp.reshape(bb, h1p, w2p)
    tmp = jnp.transpose(tmp, (1, 0, 2)).reshape(h1p, bb * w2p)
    out = jnp.dot(wh_ref[...], tmp,
                  preferred_element_type=jnp.float32,
                  precision=jax.lax.Precision.HIGHEST)      # (h2, bb*w2p)

    # 3) Relayout back to the (bb, h2, w2p) output block and store lane-dense.
    out = jnp.transpose(out.reshape(h2, bb, w2p), (1, 0, 2))
    o_ref[...] = out.astype(o_ref.dtype)


def resize_module_cv2_pallas(x: jax.Array, h2: int, w2: int, *,
                             use_bfloat16: bool = False) -> jax.Array:
    """x: (N, C, h1, w1) float in [0, 1].  Returns (N, C, h2, w2)."""
    n, c, h1, w1 = x.shape
    b = n * c
    compute_dtype = jnp.bfloat16 if use_bfloat16 else jnp.float32
    cdt_itemsize = jnp.dtype(compute_dtype).itemsize
    sublane = 16 if compute_dtype == jnp.bfloat16 else 8

    w2p = _round_up(w2, _LANE)            # lane-dense output stores
    h1p = _round_up(h1, sublane)          # keep in-kernel reshapes layout no-ops
    wh, wwt = _resize_weights(h1, w1, h2, w2, h1p, w2p,
                              jnp.dtype(compute_dtype).name)

    # Fuse N and C; keep the input in its HBM dtype (cast happens in-kernel).
    xf = x.reshape(b, h1, w1)
    if h1p != h1:
        xf = jnp.pad(xf, ((0, 0), (0, h1p - h1), (0, 0)))
    in_itemsize = xf.dtype.itemsize

    # --- Per-generation VMEM budget (review items 2, 3, 4) ------------------
    try:
        vmem_cap = int(pltpu.get_tpu_info().vmem_capacity_bytes)
    except Exception:
        vmem_cap = 64 << 20               # conservative: v7x per-core VMEM
    footprint_budget = min(int(0.40 * vmem_cap), 48 << 20)
    vmem_limit = max(int(0.625 * vmem_cap), 32 << 20)

    # Real per-step footprint: 2x double-buffered input + 2x output block,
    # f32 intermediates (width-GEMM out + relayout copy, height-GEMM out +
    # transpose copy), plus the (double-buffered) resident weights.
    weights_bytes = 2 * (int(wwt.size) + int(wh.size)) * cdt_itemsize
    per_img = (2 * h1p * w1 * in_itemsize
               + 2 * h2 * w2p * cdt_itemsize
               + 2 * h1p * w2p * 4
               + 2 * h2 * w2p * 4)
    bb = max(1, (footprint_budget - weights_bytes) // max(per_img, 1))
    # Keep >= 2 grid steps so the "parallel" axis can use both v7x TCs (item 5).
    bb = min(bb, max(1, pl.cdiv(b, 2)), b)
    if bb >= 8:
        bb = (bb // 8) * 8                # sublane-aligned leading dim
    # No exact-divisibility search (item 6): cdiv grid, partial last block is
    # safe because images are independent and OOB block writes are masked.
    grid = (pl.cdiv(b, bb),)

    flops = 2 * b * (h1p * w1 * w2p + h2 * h1p * w2p)
    bytes_accessed = (b * h1p * w1 * in_itemsize
                      + b * h2 * w2p * cdt_itemsize
                      + (int(wwt.size) + int(wh.size)) * cdt_itemsize)

    out_padded = pl.pallas_call(
        _resize_kernel,
        out_shape=jax.ShapeDtypeStruct((b, h2, w2p), compute_dtype),
        grid_spec=pltpu.PrefetchScalarGridSpec(
            num_scalar_prefetch=0,
            grid=grid,
            in_specs=[
                pl.BlockSpec((w1, w2p), lambda i: (0, 0)),        # Wwt (resident)
                pl.BlockSpec((h2, h1p), lambda i: (0, 0)),        # Wh  (resident)
                pl.BlockSpec((bb, h1p, w1), lambda i: (i, 0, 0)),  # image block
            ],
            out_specs=pl.BlockSpec((bb, h2, w2p), lambda i: (i, 0, 0)),
        ),
        compiler_params=pltpu.CompilerParams(
            dimension_semantics=("parallel",),
            vmem_limit_bytes=int(vmem_limit),
        ),
        cost_estimate=pl.CostEstimate(
            flops=int(flops), transcendentals=0,
            bytes_accessed=int(bytes_accessed)),
    )(wwt, wh, xf)

    # Depad + restore NCHW.  Keep the wrapper under the caller's jit so this
    # slice fuses with downstream consumers (review item 9).
    out = out_padded[:, :, :w2].reshape(n, c, h2, w2)
    return out.astype(x.dtype)


def _reference_resize(x: np.ndarray, h2: int, w2: int) -> np.ndarray:
    n, c, h1, w1 = x.shape
    wh = _pil_bilinear_matrix(h1, h2)
    ww = _pil_bilinear_matrix(w1, w2)
    return np.einsum("ab,ncbd,ed->ncae", wh, x, ww)


if __name__ == "__main__":
    key = jax.random.PRNGKey(0)
    N, C, H1, W1 = 2, 4, 16, 16
    H2, W2 = 8, 8
    x = jax.random.uniform(key, (N, C, H1, W1), dtype=jnp.float32)

    fn = jax.jit(lambda a: resize_module_cv2_pallas(a, H2, W2))
    out = jax.block_until_ready(fn(x))

    ref = _reference_resize(np.asarray(x, dtype=np.float64), H2, W2)
    assert out.shape == (N, C, H2, W2), out.shape
    # Tolerance covers the MXU's reduced-precision f32 matmul passes on
    # generations/precisions where full f32 accumulation is not used.
    np.testing.assert_allclose(np.asarray(out, dtype=np.float64), ref,
                               rtol=1e-2, atol=1e-2)

    print("KERNEL_OK")
</pallas_src>

<mosaic_0001>
module attributes {stable_mosaic.version = 11 : i64} {
  func.func @_resize_kernel(%arg0: i32, %arg1: memref<16x128xf32, #tpu.memory_space<vmem>>, %arg2: memref<8x16xf32, #tpu.memory_space<vmem>>, %arg3: memref<4x16x16xf32, #tpu.memory_space<vmem>>, %arg4: memref<4x8x128xf32, #tpu.memory_space<vmem>>) attributes {dimension_semantics = [#tpu.dimension_semantics<parallel>], iteration_bounds = array<i64: 2>, scalar_prefetch = 0 : i64, scratch_operands = 0 : i64, tpu.core_type = #tpu.core_type<tc>, window_params = [{pipeline_mode = #tpu.pipeline_mode<synchronous>, transform_indices = @transform_0, window_bounds = array<i64: 16, 128>}, {pipeline_mode = #tpu.pipeline_mode<synchronous>, transform_indices = @transform_1, window_bounds = array<i64: 8, 16>}, {transform_indices = @transform_2, window_bounds = array<i64: 4, 16, 16>}, {transform_indices = @transform_3, window_bounds = array<i64: 4, 8, 128>}]} {
    %c0 = arith.constant 0 : index
    %c0_0 = arith.constant 0 : index
    %c0_1 = arith.constant 0 : index
    %0 = vector.load %arg3[%c0, %c0_0, %c0_1] : memref<4x16x16xf32, #tpu.memory_space<vmem>>, vector<4x16x16xf32>
    %1 = vector.shape_cast %0 : vector<4x16x16xf32> to vector<64x16xf32>
    %c0_2 = arith.constant 0 : index
    %c0_3 = arith.constant 0 : index
    %2 = vector.load %arg1[%c0_2, %c0_3] : memref<16x128xf32, #tpu.memory_space<vmem>>, vector<16x128xf32>
    %cst = arith.constant dense<0.000000e+00> : vector<64x128xf32>
    %3 = tpu.matmul %1, %2, %cst {dimension_numbers = #tpu.dot_dimension_numbers<[1], [0], [0], [1], [0, 0, 1, 1], [], []>, precision = #tpu.contract_precision<fp32>} : vector<64x16xf32>, vector<16x128xf32>, vector<64x128xf32> -> vector<64x128xf32>
    %4 = vector.shape_cast %3 : vector<64x128xf32> to vector<4x16x128xf32>
    %5 = tpu.transpose %4, [1, 0, 2] : vector<4x16x128xf32> -> vector<16x4x128xf32>
    %6 = vector.shape_cast %5 : vector<16x4x128xf32> to vector<16x512xf32>
    %c0_4 = arith.constant 0 : index
    %c0_5 = arith.constant 0 : index
    %7 = vector.load %arg2[%c0_4, %c0_5] : memref<8x16xf32, #tpu.memory_space<vmem>>, vector<8x16xf32>
    %cst_6 = arith.constant dense<0.000000e+00> : vector<8x512xf32>
    %8 = tpu.matmul %7, %6, %cst_6 {dimension_numbers = #tpu.dot_dimension_numbers<[1], [0], [0], [1], [0, 0, 1, 1], [], []>, precision = #tpu.contract_precision<fp32>} : vector<8x16xf32>, vector<16x512xf32>, vector<8x512xf32> -> vector<8x512xf32>
    %9 = vector.shape_cast %8 : vector<8x512xf32> to vector<8x4x128xf32>
    %10 = tpu.transpose %9, [1, 0, 2] : vector<8x4x128xf32> -> vector<4x8x128xf32>
    %c0_7 = arith.constant 0 : index
    %c0_8 = arith.constant 0 : index
    %c0_9 = arith.constant 0 : index
    %11 = vector.load %arg4[%c0_7, %c0_8, %c0_9] : memref<4x8x128xf32, #tpu.memory_space<vmem>>, vector<4x8x128xf32>
    tpu.vector_store %arg4[%c0_7, %c0_8, %c0_9], %10 {strides = array<i32>} : memref<4x8x128xf32, #tpu.memory_space<vmem>>, vector<4x8x128xf32>,
    return
  }
  func.func @transform_0(%arg0: i32) -> (i32, i32) {
    %c0_i32 = arith.constant 0 : i32
    %c0_i32_0 = arith.constant 0 : i32
    %c0_i32_1 = arith.constant 0 : i32
    return %c0_i32, %c0_i32_0 : i32, i32
  }
  func.func @transform_1(%arg0: i32) -> (i32, i32) {
    %c0_i32 = arith.constant 0 : i32
    %c0_i32_0 = arith.constant 0 : i32
    %c0_i32_1 = arith.constant 0 : i32
    return %c0_i32, %c0_i32_0 : i32, i32
  }
  func.func @transform_2(%arg0: i32) -> (i32, i32, i32) {
    %c0_i32 = arith.constant 0 : i32
    %c0_i32_0 = arith.constant 0 : i32
    %c0_i32_1 = arith.constant 0 : i32
    return %arg0, %c0_i32, %c0_i32_0 : i32, i32, i32
  }
  func.func @transform_3(%arg0: i32) -> (i32, i32, i32) {
    %c0_i32 = arith.constant 0 : i32
    %c0_i32_0 = arith.constant 0 : i32
    %c0_i32_1 = arith.constant 0 : i32
    return %arg0, %c0_i32, %c0_i32_0 : i32, i32, i32
  }
}

</mosaic_0001>

<llo_original>
// kernel: _lambda_.1
$region0: #{_lambda_.1}
  #allocation0 [shape = 'u32[]', space=smem, size = 0x4, offset = 0x4, fixed_abs, tag = 'smem constant byte address 0x4 - core index']
  #allocation1 [shape = 'u32[144,128]{1,0:T(1,128)}', space=vmem, size = 0x12000, scoped, tag = 'internal scratch']
  %s0 = inlined_call_operand.hbm [shape: f32[16,128], index: 0, kind: input, shape index: {}]
  %s1 = inlined_call_operand.hbm [shape: f32[8,16], index: 1, kind: input, shape index: {}]
  %s2 = inlined_call_operand.hbm [shape: f32[8,16,16], index: 2, kind: input, shape index: {}]
  %s3 = inlined_call_operand.hbm [shape: f32[8,8,128], index: 3, kind: output, shape index: {}]
  %s4 = sld [smem:[#allocation0]]
  $region57: #{_lambda_.1} parent=0
    _
  %s6 = ssub.s32 1, %s4
  %s7 = scalar_select 0, %s6, %s4
  $region1: #{_lambda_.1} parent=0
    #allocation2 [shape = 'u8[8192]{0}', space=vmem, size = 0x2000, scoped, tag = 'input window, operand 0, single buffered']
    #allocation3 [shape = 's32[2]{0}', space=sflag, size = 0x8, scoped, tag = 'scoped memory for _lambda_.1']
    #allocation4 [shape = 's32[2]{0}', space=sflag, size = 0x8, scoped, tag = 'scoped memory for _lambda_.1']
    #allocation5 [shape = 'u8[4096]{0}', space=vmem, size = 0x1000, scoped, tag = 'input window, operand 1, single buffered']
    #allocation6 [shape = 's32[1]{0}', space=sflag, size = 0x4, scoped, tag = 'scoped memory for _lambda_.1']
    #allocation7 [shape = 'u8[65536]{0}', space=vmem, size = 0x10000, scoped, tag = 'input window, operand 2']
    #allocation8 [shape = 'u8[32768]{0}', space=vmem, size = 0x8000, scoped, tag = 'output window, operand 0']
    %8 = vsyncpa [#allocation3], 0
    %9 = vsyncpa [#allocation6], 0
    %10 = vsyncpa [#allocation4], 0
    %s11 = scalar_lea.sflag [#allocation4], 1
    %12 = vsyncpa %s11, 0
    loop: start=0, step=1, limit=4
    $region2: #{_lambda_.1} parent=1 // loop_pre_header
      _
    $region3: #{_lambda_.1} parent=1 // loop_header
      %s14 = sphi 0, %s18
      %p15 = scmp.ge.s32.totalorder %s14, 4
      %s22 = sphi 0, %s22
      %s24 = sphi 0, %s22
      %s25 = sphi 0, %s24
      %s39 = sphi 0, %s25
      %s43 = sphi 0, %s43
      %s45 = sphi 0, %s43
      %s46 = sphi 0, %s45
      %s60 = sphi 0, %s46
      %s66 = sphi 0, %s68
      %s69 = sphi 0, %s66
      %s70 = sphi 0, %s69
      %s86 = sphi 0, %s70
      %s92 = sphi 0, %s94
      %s95 = sphi 0, %s92
      %s96 = sphi 0, %s95
      %s112 = sphi 0, %s96
    $region4: #{_lambda_.1} parent=1 // loop_header_branch
      %17 = sbr.rel (%p15) target = $region8
    $region5: #{_lambda_.1} parent=1 // loop_body
      %s19 = ssub.s32 %s14, 1
      %s20 = ssub.s32 %s14, 2
      %s21 = sadd.s32 %s14, 1
      %s23 = sadd.s32 %s22, 1
      %p26 = scmp.eq.s32.totalorder %s14, 1
      %p27 = scmp.ne.s32.totalorder %s22, %s24
      %p28 = scmp.eq.s32.totalorder %s14, 0
      %p29 = por %p27, %p28
      %p30 = scmp.ne.s32.totalorder %s22, %s24
      %p31 = scmp.eq.s32.totalorder %s19, 1
      %p32 = por %p30, %p31
      %p33 = scmp.ne.s32.totalorder %s24, %s25
      %p34 = scmp.eq.s32.totalorder %s19, 0
      %p35 = por %p33, %p34
      %p36 = scmp.ne.s32.totalorder %s24, %s25
      %p37 = scmp.eq.s32.totalorder %s20, 1
      %p38 = por %p36, %p37
      %p40 = scmp.ne.s32.totalorder %s25, %s39
      %p41 = scmp.eq.s32.totalorder %s20, 0
      %p42 = por %p40, %p41
      %s44 = sadd.s32 %s43, 1
      %p47 = scmp.eq.s32.totalorder %s14, 1
      %p48 = scmp.ne.s32.totalorder %s43, %s45
      %p49 = scmp.eq.s32.totalorder %s14, 0
      %p50 = por %p48, %p49
      %p51 = scmp.ne.s32.totalorder %s43, %s45
      %p52 = scmp.eq.s32.totalorder %s19, 1
      %p53 = por %p51, %p52
      %p54 = scmp.ne.s32.totalorder %s45, %s46
      %p55 = scmp.eq.s32.totalorder %s19, 0
      %p56 = por %p54, %p55
      %p57 = scmp.ne.s32.totalorder %s45, %s46
      %p58 = scmp.eq.s32.totalorder %s20, 1
      %p59 = por %p57, %p58
      %p61 = scmp.ne.s32.totalorder %s46, %s60
      %p62 = scmp.eq.s32.totalorder %s20, 0
      %p63 = por %p61, %p62
      %s64 = ssub.s32 %s14, %s21
      %p65 = scmp.eq.s32.totalorder %s64, 0
      %s67 = sadd.s32 %s66, 1
      %s68 = scalar_select %p65, %s66, %s67
      %p71 = pneg %p65
      %p72 = scmp.eq.s32.totalorder %s14, 1
      %p73 = por %p71, %p72
      %p74 = scmp.ne.s32.totalorder %s66, %s69
      %p75 = scmp.eq.s32.totalorder %s14, 0
      %p76 = por %p74, %p75
      %p77 = scmp.ne.s32.totalorder %s66, %s69
      %p78 = scmp.eq.s32.totalorder %s19, 1
      %p79 = por %p77, %p78
      %p80 = scmp.ne.s32.totalorder %s69, %s70
      %p81 = scmp.eq.s32.totalorder %s19, 0
      %p82 = por %p80, %p81
      %p83 = scmp.ne.s32.totalorder %s69, %s70
      %p84 = scmp.eq.s32.totalorder %s20, 1
      %p85 = por %p83, %p84
      %p87 = scmp.ne.s32.totalorder %s70, %s86
      %p88 = scmp.eq.s32.totalorder %s20, 0
      %p89 = por %p87, %p88
      %s90 = ssub.s32 %s14, %s21
      %p91 = scmp.eq.s32.totalorder %s90, 0
      %s93 = sadd.s32 %s92, 1
      %s94 = scalar_select %p91, %s92, %s93
      %p97 = pneg %p91
      %p98 = scmp.eq.s32.totalorder %s14, 1
      %p99 = por %p97, %p98
      %p100 = scmp.ne.s32.totalorder %s92, %s95
      %p101 = scmp.eq.s32.totalorder %s14, 0
      %p102 = por %p100, %p101
      %p103 = scmp.ne.s32.totalorder %s92, %s95
      %p104 = scmp.eq.s32.totalorder %s19, 1
      %p105 = por %p103, %p104
      %p106 = scmp.ne.s32.totalorder %s95, %s96
      %p107 = scmp.eq.s32.totalorder %s19, 0
      %p108 = por %p106, %p107
      %p109 = scmp.ne.s32.totalorder %s95, %s96
      %p110 = scmp.eq.s32.totalorder %s20, 1
      %p111 = por %p109, %p110
      %p113 = scmp.ne.s32.totalorder %s96, %s112
      %p114 = scmp.eq.s32.totalorder %s20, 0
      %p115 = por %p113, %p114
      %p116 = scmp.le.s32.totalorder 1, %s14
      %p117 = scmp.lt.s32.totalorder %s14, 3
      %p118 = pnand %p116, %p117
      %p119 = pneg %p118
      // Predicated region
      $region9: #{_lambda_.1} parent=5 // pred_check
        _
      $region10: #{_lambda_.1} parent=5 // pred_check_branch
        %121 = sbr.rel (%p118) target = $region12
      $region11: #{_lambda_.1} parent=5 // pred_region
        %s122 = ssub.s32 %s14, 1
        // Predicated region
        $region13: #{_lambda_.1} parent=11 // pred_check
          %p123 = pneg %p35
        $region14: #{_lambda_.1} parent=11 // pred_check_branch
          %125 = sbr.rel (%p123) target = $region16
        $region15: #{_lambda_.1} parent=11 // pred_region
          %s127 = ssub.s32 256, 256
          %128 = vsyncadd [#allocation3], %s127
          %s129 = sshll.u32 [#allocation2], 4
          %s130 = int_to_ptr.vmem [resolvable:$true] %s129
          %135 = dma.hbm_to_vmem [thread:$0]  %s0, 256, %s130, [#allocation3], 128, 128, 8
        $region16: #{_lambda_.1} parent=11 // pred_fallthru
          _
        // Predicated region
        $region17: #{_lambda_.1} parent=11 // pred_check
          %p136 = pneg %p56
        $region18: #{_lambda_.1} parent=11 // pred_check_branch
          %138 = sbr.rel (%p136) target = $region20
        $region19: #{_lambda_.1} parent=11 // pred_region
          %s140 = ssub.s32 128, 128
          %141 = vsyncadd [#allocation6], %s140
          %s143 = sshll.u32 [#allocation5], 4
          %s144 = int_to_ptr.vmem [resolvable:$true] %s143
          %146 = dma.hbm_to_vmem [thread:$0]  %s1, 128, %s144, [#allocation6]
        $region20: #{_lambda_.1} parent=11 // pred_fallthru
          _
      $region12: #{_lambda_.1} parent=5 // pred_fallthru
        _
      %p147 = scmp.lt.s32.totalorder %s14, 2
      // Predicated region
      $region21: #{_lambda_.1} parent=5 // pred_check
        %p148 = pneg %p147
      $region22: #{_lambda_.1} parent=5 // pred_check_branch
        %150 = sbr.rel (%p148) target = $region24
      $region23: #{_lambda_.1} parent=5 // pred_region
        // Predicated region
        $region25: #{_lambda_.1} parent=23 // pred_check
          %p151 = pneg %p76
        $region26: #{_lambda_.1} parent=23 // pred_check_branch
          %153 = sbr.rel (%p151) target = $region28
        $region27: #{_lambda_.1} parent=23 // pred_region
          %s154 = sand.u32 %s14, 1
          %s155 = scalar_lea.sflag [#allocation3], %s154
          %s156 = sand.u32 %s66, 1
          %s157 = smul.addr %s156, 64
          %s158 = scalar_lea.vmem [#allocation7], %s157
          %s159 = smul.u32 4, %s14
          %s161 = ssub.s32 1024, 1024
          %162 = vsyncadd %s155, %s161
          %s163 = smul.addr %s159, 2
          %s164 = smul.addr %s163, 128
          %s165 = scalar_lea.hbm %s2, %s164
          %s166 = sshll.u32 %s158, 4
          %s167 = int_to_ptr.vmem [resolvable:$true] %s166
          %172 = dma.hbm_to_vmem [thread:$0]  %s165, 1024, %s167, %s155, 128, 128, 8
        $region28: #{_lambda_.1} parent=23 // pred_fallthru
          _
      $region24: #{_lambda_.1} parent=5 // pred_fallthru
        _
      %p173 = scmp.le.s32.totalorder 1, %s14
      %p174 = scmp.lt.s32.totalorder %s14, 3
      %p175 = pnand %p173, %p174
      %p176 = pneg %p175
      // Predicated region
      $region29: #{_lambda_.1} parent=5 // pred_check
        _
      $region30: #{_lambda_.1} parent=5 // pred_check_branch
        %178 = sbr.rel (%p175) target = $region32
      $region31: #{_lambda_.1} parent=5 // pred_region
        %s179 = ssub.s32 %s14, 1
        // Predicated region
        $region33: #{_lambda_.1} parent=31 // pred_check
          %p180 = pneg %p35
        $region34: #{_lambda_.1} parent=31 // pred_check_branch
          %182 = sbr.rel (%p180) target = $region36
        $region35: #{_lambda_.1} parent=31 // pred_region
          %183 = dma.done [#allocation3], 256
        $region36: #{_lambda_.1} parent=31 // pred_fallthru
          _
        // Predicated region
        $region37: #{_lambda_.1} parent=31 // pred_check
          %p184 = pneg %p56
        $region38: #{_lambda_.1} parent=31 // pred_check_branch
          %186 = sbr.rel (%p184) target = $region40
        $region39: #{_lambda_.1} parent=31 // pred_region
          %187 = dma.done [#allocation6], 128
        $region40: #{_lambda_.1} parent=31 // pred_fallthru
          _
        %s188 = sand.u32 %s19, 1
        %s189 = scalar_lea.sflag [#allocation3], %s188
        %s190 = sand.u32 %s69, 1
        %s191 = smul.addr %s190, 64
        %s192 = scalar_lea.vmem [#allocation7], %s191
        // Predicated region
        $region41: #{_lambda_.1} parent=31 // pred_check
          %p193 = pneg %p82
        $region42: #{_lambda_.1} parent=31 // pred_check_branch
          %195 = sbr.rel (%p193) target = $region44
        $region43: #{_lambda_.1} parent=31 // pred_region
          %196 = dma.done %s189, 1024
        $region44: #{_lambda_.1} parent=31 // pred_fallthru
          _
        %p197 = pneg %p35
        %p198 = pneg %p32
        %p199 = pneg %p56
        %p200 = pneg %p53
        %s201 = sand.u32 %s19, 1
        %s202 = scalar_lea.sflag [#allocation3], %s201
        %s203 = sand.u32 %s69, 1
        %s204 = smul.addr %s203, 64
        %s205 = scalar_lea.vmem [#allocation7], %s204
        %p206 = pneg %p82
        %p207 = pneg %p79
        %p208 = pneg %p108
        %p209 = pneg %p105
        %s210 = sand.u32 %s95, 1
        %s211 = scalar_lea.sflag [#allocation4], %s210
        %s212 = sand.u32 %s95, 1
        %s213 = smul.addr %s212, 32
        %s214 = scalar_lea.vmem [#allocation8], %s213
        %s215 = smul.u32 4, %s19
        %s216 = smul.u32 4, %s19
        %v217 = vld [vmem:[%s192] sm:$0xff]
        %v218 = vld [vmem:[%s192 + $0x8] sm:$0xff]
        %v219 = vld [vmem:[%s192 + $0x10] sm:$0xff]
        %v220 = vld [vmem:[%s192 + $0x18] sm:$0xff]
        %v221 = vld [vmem:[%s192 + $0x20] sm:$0xff]
        %v222 = vld [vmem:[%s192 + $0x28] sm:$0xff]
        %v223 = vld [vmem:[%s192 + $0x30] sm:$0xff]
        %v224 = vld [vmem:[%s192 + $0x38] sm:$0xff]
        %v225 = vld [vmem:[#allocation2] sm:$0xff]
        %v226 = vld [vmem:[#allocation2 + $0x8] sm:$0xff]
        %vm227 = vcmask 130048
        %v229 = vsel %vm227, %v217, 0
        %v232 = vsel %vm227, %v218, 0
        %v235 = vsel %vm227, %v219, 0
        %v238 = vsel %vm227, %v220, 0
        %v241 = vsel %vm227, %v221, 0
        %v244 = vsel %vm227, %v222, 0
        %v247 = vsel %vm227, %v223, 0
        %v250 = vsel %vm227, %v224, 0
        %252 = vmatprep.subr.mxu0 0.0
        %253 = vmatpush1.msra.mxu0 0.0
        %254 = vmatprep.subr.mxu0 0.0
        %255 = vmatpush1.msra.mxu0 0.0
        %256 = vmatprep.subr.mxu0 0.0
        %257 = vmatpush1.msra.mxu0 0.0
        %258 = vmatprep.subr.mxu0 0.0
        %259 = vmatpush1.msra.mxu0 0.0
        %260 = vmatprep.subr.mxu0 0.0
        %261 = vmatpush1.msra.mxu0 0.0
        %262 = vmatprep.subr.mxu0 0.0
        %263 = vmatpush1.msra.mxu0 0.0
        %264 = vmatprep.subr.mxu0 0.0
        %265 = vmatpush1.msra.mxu0 0.0
        %266 = vmatprep.subr.mxu0 0.0
        %267 = vmatpush1.msra.mxu0 0.0
        %268 = vmatprep.subr.mxu0 0.0
        %269 = vmatpush1.msra.mxu0 0.0
        %270 = vmatprep.subr.mxu0 0.0
        %271 = vmatpush1.msra.mxu0 0.0
        %272 = vmatprep.subr.mxu0 0.0
        %273 = vmatpush1.msra.mxu0 0.0
        %274 = vmatprep.subr.mxu0 0.0
        %275 = vmatpush1.msra.mxu0 0.0
        %276 = vmatprep.subr.mxu0 0.0
        %277 = vmatpush1.msra.mxu0 0.0
        %278 = vmatprep.subr.mxu0 0.0
        %279 = vmatpush1.msra.mxu0 0.0
        %280 = vmatprep.subr.mxu0 0.0
        %v281 = vand.u32 %v226, 4294901760
        %282 = vmatpush1.msra.mxu0 %v281
        %283 = vmatprep.subr.mxu0 0.0
        %v284 = vand.u32 %v225, 4294901760
        %285 = vmatpush1.msra.mxu0 %v284
        %286 = vmatprep.subr.mxu0 0.0
        %287 = vmatpush2.msra.mxu0 0.0
        %288 = vmatprep.subr.mxu0 0.0
        %289 = vmatpush2.msra.mxu0 0.0
        %290 = vmatprep.subr.mxu0 0.0
        %291 = vmatpush2.msra.mxu0 0.0
        %292 = vmatprep.subr.mxu0 0.0
        %293 = vmatpush2.msra.mxu0 0.0
        %294 = vmatprep.subr.mxu0 0.0
        %295 = vmatpush2.msra.mxu0 0.0
        %296 = vmatprep.subr.mxu0 0.0
        %297 = vmatpush2.msra.mxu0 0.0
        %298 = vmatprep.subr.mxu0 0.0
        %299 = vmatpush2.msra.mxu0 0.0
        %300 = vmatprep.subr.mxu0 0.0
        %301 = vmatpush2.msra.mxu0 0.0
        %302 = vmatprep.subr.mxu0 0.0
        %303 = vmatpush2.msra.mxu0 0.0
        %304 = vmatprep.subr.mxu0 0.0
        %305 = vmatpush2.msra.mxu0 0.0
        %306 = vmatprep.subr.mxu0 0.0
        %307 = vmatpush2.msra.mxu0 0.0
        %308 = vmatprep.subr.mxu0 0.0
        %309 = vmatpush2.msra.mxu0 0.0
        %310 = vmatprep.subr.mxu0 0.0
        %311 = vmatpush2.msra.mxu0 0.0
        %312 = vmatprep.subr.mxu0 0.0
        %313 = vmatpush2.msra.mxu0 0.0
        %314 = vmatprep.subr.mxu0 0.0
        %315 = vmatpush2.msra.mxu0 0.0
        %316 = vmatprep.subr.mxu0 0.0
        %317 = vmatpush2.msra.mxu0 0.0
        %318 = vmatprep.mubr.f32.mxu0 0.0
        %v319 = vand.u32 %v229, 4294901760
        %v320 = vsub.f32 %v229, %v319
        %v321 = vand.u32 %v320, 4294901760
        %v322 = vsub.f32 %v320, %v321
        %v323 = vand.u32 %v322, 4294901760
        %324 = vmatmul.mubr.f32.gmra.mxu0 %v323
        %v325 = vpop.f32.mrf.mxu0
        %v326 = vadd.f32 0.0, %v325
        %v327 = vpop.f32.mrf.mxu0
        %328 = vmatprep.mubr.f32.mxu0 0.0
        %v329 = vand.u32 %v232, 4294901760
        %v330 = vsub.f32 %v232, %v329
        %v331 = vand.u32 %v330, 4294901760
        %v332 = vsub.f32 %v330, %v331
        %v333 = vand.u32 %v332, 4294901760
        %334 = vmatmul.mubr.f32.gmra.mxu0 %v333
        %v335 = vpop.f32.mrf.mxu0
        %v336 = vadd.f32 0.0, %v335
        %v337 = vpop.f32.mrf.mxu0
        %338 = vmatprep.mubr.f32.mxu0 0.0
        %v339 = vand.u32 %v235, 4294901760
        %v340 = vsub.f32 %v235, %v339
        %v341 = vand.u32 %v340, 4294901760
        %v342 = vsub.f32 %v340, %v341
        %v343 = vand.u32 %v342, 4294901760
        %344 = vmatmul.mubr.f32.gmra.mxu0 %v343
        %v345 = vpop.f32.mrf.mxu0
        %v346 = vadd.f32 0.0, %v345
        %v347 = vpop.f32.mrf.mxu0
        %348 = vmatprep.mubr.f32.mxu0 0.0
        %v349 = vand.u32 %v238, 4294901760
        %v350 = vsub.f32 %v238, %v349
        %v351 = vand.u32 %v350, 4294901760
        %v352 = vsub.f32 %v350, %v351
        %v353 = vand.u32 %v352, 4294901760
        %354 = vmatmul.mubr.f32.gmra.mxu0 %v353
        %v355 = vpop.f32.mrf.mxu0
        %v356 = vadd.f32 0.0, %v355
        %v357 = vpop.f32.mrf.mxu0
        %358 = vmatprep.mubr.f32.mxu0 0.0
        %v359 = vand.u32 %v241, 4294901760
        %v360 = vsub.f32 %v241, %v359
        %v361 = vand.u32 %v360, 4294901760
        %v362 = vsub.f32 %v360, %v361
        %v363 = vand.u32 %v362, 4294901760
        %364 = vmatmul.mubr.f32.gmra.mxu0 %v363
        %v365 = vpop.f32.mrf.mxu0
        %v366 = vadd.f32 0.0, %v365
        %v367 = vpop.f32.mrf.mxu0
        %368 = vmatprep.mubr.f32.mxu0 0.0
        %v369 = vand.u32 %v244, 4294901760
        %v370 = vsub.f32 %v244, %v369
        %v371 = vand.u32 %v370, 4294901760
        %v372 = vsub.f32 %v370, %v371
        %v373 = vand.u32 %v372, 4294901760
        %374 = vmatmul.mubr.f32.gmra.mxu0 %v373
        %v375 = vpop.f32.mrf.mxu0
        %v376 = vadd.f32 0.0, %v375
        %v377 = vpop.f32.mrf.mxu0
        %378 = vmatprep.mubr.f32.mxu0 0.0
        %v379 = vand.u32 %v247, 4294901760
        %v380 = vsub.f32 %v247, %v379
        %v381 = vand.u32 %v380, 4294901760
        %v382 = vsub.f32 %v380, %v381
        %v383 = vand.u32 %v382, 4294901760
        %384 = vmatmul.mubr.f32.gmra.mxu0 %v383
        %v385 = vpop.f32.mrf.mxu0
        %v386 = vadd.f32 0.0, %v385
        %v387 = vpop.f32.mrf.mxu0
        %388 = vmatprep.mubr.f32.mxu0 0.0
        %v389 = vand.u32 %v250, 4294901760
        %v390 = vsub.f32 %v250, %v389
        %v391 = vand.u32 %v390, 4294901760
        %v392 = vsub.f32 %v390, %v391
        %v393 = vand.u32 %v392, 4294901760
        %394 = vmatmul.mubr.f32.gmra.mxu0 %v393
        %v395 = vpop.f32.mrf.mxu0
        %v396 = vadd.f32 0.0, %v395
        %v397 = vpop.f32.mrf.mxu0
        %398 = vdwg.mxu0
        %399 = vmatprep.subr.mxu0 0.0
        %400 = vmatpush1.msra.mxu0 0.0
        %401 = vmatprep.subr.mxu0 0.0
        %402 = vmatpush1.msra.mxu0 0.0
        %403 = vmatprep.subr.mxu0 0.0
        %404 = vmatpush1.msra.mxu0 0.0
        %405 = vmatprep.subr.mxu0 0.0
        %406 = vmatpush1.msra.mxu0 0.0
        %407 = vmatprep.subr.mxu0 0.0
        %408 = vmatpush1.msra.mxu0 0.0
        %409 = vmatprep.subr.mxu0 0.0
        %410 = vmatpush1.msra.mxu0 0.0
        %411 = vmatprep.subr.mxu0 0.0
        %412 = vmatpush1.msra.mxu0 0.0
        %413 = vmatprep.subr.mxu0 0.0
        %414 = vmatpush1.msra.mxu0 0.0
        %415 = vmatprep.subr.mxu0 0.0
        %416 = vmatpush1.msra.mxu0 0.0
        %417 = vmatprep.subr.mxu0 0.0
        %418 = vmatpush1.msra.mxu0 0.0
        %419 = vmatprep.subr.mxu0 0.0
        %420 = vmatpush1.msra.mxu0 0.0
        %421 = vmatprep.subr.mxu0 0.0
        %422 = vmatpush1.msra.mxu0 0.0
        %423 = vmatprep.subr.mxu0 0.0
        %424 = vmatpush1.msra.mxu0 0.0
        %425 = vmatprep.subr.mxu0 0.0
        %426 = vmatpush1.msra.mxu0 0.0
        %427 = vmatprep.subr.mxu0 0.0
        %v428 = vand.u32 %v226, 4294901760
        %v429 = vsub.f32 %v226, %v428
        %v430 = vand.u32 %v429, 4294901760
        %v431 = vsub.f32 %v429, %v430
        %v432 = vand.u32 %v431, 4294901760
        %433 = vmatpush1.msra.mxu0 %v432
        %434 = vmatprep.subr.mxu0 0.0
        %v435 = vand.u32 %v225, 4294901760
        %v436 = vsub.f32 %v225, %v435
        %v437 = vand.u32 %v436, 4294901760
        %v438 = vsub.f32 %v436, %v437
        %v439 = vand.u32 %v438, 4294901760
        %440 = vmatpush1.msra.mxu0 %v439
        %441 = vmatprep.subr.mxu0 0.0
        %442 = vmatpush2.msra.mxu0 0.0
        %443 = vmatprep.subr.mxu0 0.0
        %444 = vmatpush2.msra.mxu0 0.0
        %445 = vmatprep.subr.mxu0 0.0
        %446 = vmatpush2.msra.mxu0 0.0
        %447 = vmatprep.subr.mxu0 0.0
        %448 = vmatpush2.msra.mxu0 0.0
        %449 = vmatprep.subr.mxu0 0.0
        %450 = vmatpush2.msra.mxu0 0.0
        %451 = vmatprep.subr.mxu0 0.0
        %452 = vmatpush2.msra.mxu0 0.0
        %453 = vmatprep.subr.mxu0 0.0
        %454 = vmatpush2.msra.mxu0 0.0
        %455 = vmatprep.subr.mxu0 0.0
        %456 = vmatpush2.msra.mxu0 0.0
        %457 = vmatprep.subr.mxu0 0.0
        %458 = vmatpush2.msra.mxu0 0.0
        %459 = vmatprep.subr.mxu0 0.0
        %460 = vmatpush2.msra.mxu0 0.0
        %461 = vmatprep.subr.mxu0 0.0
        %462 = vmatpush2.msra.mxu0 0.0
        %463 = vmatprep.subr.mxu0 0.0
        %464 = vmatpush2.msra.mxu0 0.0
        %465 = vmatprep.subr.mxu0 0.0
        %466 = vmatpush2.msra.mxu0 0.0
        %467 = vmatprep.subr.mxu0 0.0
        %468 = vmatpush2.msra.mxu0 0.0
        %469 = vmatprep.subr.mxu0 0.0
        %470 = vmatpush2.msra.mxu0 0.0
        %471 = vmatprep.subr.mxu0 0.0
        %472 = vmatpush2.msra.mxu0 0.0
        %473 = vmatprep.mubr.f32.mxu0 0.0
        %v474 = vand.u32 %v229, 4294901760
        %475 = vmatmul.mubr.f32.gmra.mxu0 %v474
        %v476 = vpop.f32.mrf.mxu0
        %v477 = vadd.f32 %v326, %v476
        %v478 = vpop.f32.mrf.mxu0
        %479 = vmatprep.mubr.f32.mxu0 0.0
        %v480 = vand.u32 %v232, 4294901760
        %481 = vmatmul.mubr.f32.gmra.mxu0 %v480
        %v482 = vpop.f32.mrf.mxu0
        %v483 = vadd.f32 %v336, %v482
        %v484 = vpop.f32.mrf.mxu0
        %485 = vmatprep.mubr.f32.mxu0 0.0
        %v486 = vand.u32 %v235, 4294901760
        %487 = vmatmul.mubr.f32.gmra.mxu0 %v486
        %v488 = vpop.f32.mrf.mxu0
        %v489 = vadd.f32 %v346, %v488
        %v490 = vpop.f32.mrf.mxu0
        %491 = vmatprep.mubr.f32.mxu0 0.0
        %v492 = vand.u32 %v238, 4294901760
        %493 = vmatmul.mubr.f32.gmra.mxu0 %v492
        %v494 = vpop.f32.mrf.mxu0
        %v495 = vadd.f32 %v356, %v494
        %v496 = vpop.f32.mrf.mxu0
        %497 = vmatprep.mubr.f32.mxu0 0.0
        %v498 = vand.u32 %v241, 4294901760
        %499 = vmatmul.mubr.f32.gmra.mxu0 %v498
        %v500 = vpop.f32.mrf.mxu0
        %v501 = vadd.f32 %v366, %v500
        %v502 = vpop.f32.mrf.mxu0
        %503 = vmatprep.mubr.f32.mxu0 0.0
        %v504 = vand.u32 %v244, 4294901760
        %505 = vmatmul.mubr.f32.gmra.mxu0 %v504
        %v506 = vpop.f32.mrf.mxu0
        %v507 = vadd.f32 %v376, %v506
        %v508 = vpop.f32.mrf.mxu0
        %509 = vmatprep.mubr.f32.mxu0 0.0
        %v510 = vand.u32 %v247, 4294901760
        %511 = vmatmul.mubr.f32.gmra.mxu0 %v510
        %v512 = vpop.f32.mrf.mxu0
        %v513 = vadd.f32 %v386, %v512
        %v514 = vpop.f32.mrf.mxu0
        %515 = vmatprep.mubr.f32.mxu0 0.0
        %v516 = vand.u32 %v250, 4294901760
        %517 = vmatmul.mubr.f32.gmra.mxu0 %v516
        %v518 = vpop.f32.mrf.mxu0
        %v519 = vadd.f32 %v396, %v518
        %v520 = vpop.f32.mrf.mxu0
        %521 = vdwg.mxu0
        %522 = vmatprep.subr.mxu0 0.0
        %523 = vmatpush1.msra.mxu0 0.0
        %524 = vmatprep.subr.mxu0 0.0
        %525 = vmatpush1.msra.mxu0 0.0
        %526 = vmatprep.subr.mxu0 0.0
        %527 = vmatpush1.msra.mxu0 0.0
        %528 = vmatprep.subr.mxu0 0.0
        %529 = vmatpush1.msra.mxu0 0.0
        %530 = vmatprep.subr.mxu0 0.0
        %531 = vmatpush1.msra.mxu0 0.0
        %532 = vmatprep.subr.mxu0 0.0
        %533 = vmatpush1.msra.mxu0 0.0
        %534 = vmatprep.subr.mxu0 0.0
        %535 = vmatpush1.msra.mxu0 0.0
        %536 = vmatprep.subr.mxu0 0.0
        %537 = vmatpush1.msra.mxu0 0.0
        %538 = vmatprep.subr.mxu0 0.0
        %539 = vmatpush1.msra.mxu0 0.0
        %540 = vmatprep.subr.mxu0 0.0
        %541 = vmatpush1.msra.mxu0 0.0
        %542 = vmatprep.subr.mxu0 0.0
        %543 = vmatpush1.msra.mxu0 0.0
        %544 = vmatprep.subr.mxu0 0.0
        %545 = vmatpush1.msra.mxu0 0.0
        %546 = vmatprep.subr.mxu0 0.0
        %547 = vmatpush1.msra.mxu0 0.0
        %548 = vmatprep.subr.mxu0 0.0
        %549 = vmatpush1.msra.mxu0 0.0
        %550 = vmatprep.subr.mxu0 0.0
        %v551 = vand.u32 %v226, 4294901760
        %v552 = vsub.f32 %v226, %v551
        %553 = vmatpush1.msra.mxu0 %v552
        %554 = vmatprep.subr.mxu0 0.0
        %v555 = vand.u32 %v225, 4294901760
        %v556 = vsub.f32 %v225, %v555
        %557 = vmatpush1.msra.mxu0 %v556
        %558 = vmatprep.subr.mxu0 0.0
        %559 = vmatpush2.msra.mxu0 0.0
        %560 = vmatprep.subr.mxu0 0.0
        %561 = vmatpush2.msra.mxu0 0.0
        %562 = vmatprep.subr.mxu0 0.0
        %563 = vmatpush2.msra.mxu0 0.0
        %564 = vmatprep.subr.mxu0 0.0
        %565 = vmatpush2.msra.mxu0 0.0
        %566 = vmatprep.subr.mxu0 0.0
        %567 = vmatpush2.msra.mxu0 0.0
        %568 = vmatprep.subr.mxu0 0.0
        %569 = vmatpush2.msra.mxu0 0.0
        %570 = vmatprep.subr.mxu0 0.0
        %571 = vmatpush2.msra.mxu0 0.0
        %572 = vmatprep.subr.mxu0 0.0
        %573 = vmatpush2.msra.mxu0 0.0
        %574 = vmatprep.subr.mxu0 0.0
        %575 = vmatpush2.msra.mxu0 0.0
        %576 = vmatprep.subr.mxu0 0.0
        %577 = vmatpush2.msra.mxu0 0.0
        %578 = vmatprep.subr.mxu0 0.0
        %579 = vmatpush2.msra.mxu0 0.0
        %580 = vmatprep.subr.mxu0 0.0
        %581 = vmatpush2.msra.mxu0 0.0
        %582 = vmatprep.subr.mxu0 0.0
        %583 = vmatpush2.msra.mxu0 0.0
        %584 = vmatprep.subr.mxu0 0.0
        %585 = vmatpush2.msra.mxu0 0.0
        %586 = vmatprep.subr.mxu0 0.0
        %587 = vmatpush2.msra.mxu0 0.0
        %588 = vmatprep.subr.mxu0 0.0
        %589 = vmatpush2.msra.mxu0 0.0
        %590 = vmatprep.mubr.f32.mxu0 0.0
        %v591 = vand.u32 %v229, 4294901760
        %v592 = vsub.f32 %v229, %v591
        %593 = vmatmul.mubr.f32.gmra.mxu0 %v592
        %v594 = vpop.f32.mrf.mxu0
        %v595 = vadd.f32 %v477, %v594
        %v596 = vpop.f32.mrf.mxu0
        %597 = vmatprep.mubr.f32.mxu0 0.0
        %v598 = vand.u32 %v232, 4294901760
        %v599 = vsub.f32 %v232, %v598
        %600 = vmatmul.mubr.f32.gmra.mxu0 %v599
        %v601 = vpop.f32.mrf.mxu0
        %v602 = vadd.f32 %v483, %v601
        %v603 = vpop.f32.mrf.mxu0
        %604 = vmatprep.mubr.f32.mxu0 0.0
        %v605 = vand.u32 %v235, 4294901760
        %v606 = vsub.f32 %v235, %v605
        %607 = vmatmul.mubr.f32.gmra.mxu0 %v606
        %v608 = vpop.f32.mrf.mxu0
        %v609 = vadd.f32 %v489, %v608
        %v610 = vpop.f32.mrf.mxu0
        %611 = vmatprep.mubr.f32.mxu0 0.0
        %v612 = vand.u32 %v238, 4294901760
        %v613 = vsub.f32 %v238, %v612
        %614 = vmatmul.mubr.f32.gmra.mxu0 %v613
        %v615 = vpop.f32.mrf.mxu0
        %v616 = vadd.f32 %v495, %v615
        %v617 = vpop.f32.mrf.mxu0
        %618 = vmatprep.mubr.f32.mxu0 0.0
        %v619 = vand.u32 %v241, 4294901760
        %v620 = vsub.f32 %v241, %v619
        %621 = vmatmul.mubr.f32.gmra.mxu0 %v620
        %v622 = vpop.f32.mrf.mxu0
        %v623 = vadd.f32 %v501, %v622
        %v624 = vpop.f32.mrf.mxu0
        %625 = vmatprep.mubr.f32.mxu0 0.0
        %v626 = vand.u32 %v244, 4294901760
        %v627 = vsub.f32 %v244, %v626
        %628 = vmatmul.mubr.f32.gmra.mxu0 %v627
        %v629 = vpop.f32.mrf.mxu0
        %v630 = vadd.f32 %v507, %v629
        %v631 = vpop.f32.mrf.mxu0
        %632 = vmatprep.mubr.f32.mxu0 0.0
        %v633 = vand.u32 %v247, 4294901760
        %v634 = vsub.f32 %v247, %v633
        %635 = vmatmul.mubr.f32.gmra.mxu0 %v634
        %v636 = vpop.f32.mrf.mxu0
        %v637 = vadd.f32 %v513, %v636
        %v638 = vpop.f32.mrf.mxu0
        %639 = vmatprep.mubr.f32.mxu0 0.0
        %v640 = vand.u32 %v250, 4294901760
        %v641 = vsub.f32 %v250, %v640
        %642 = vmatmul.mubr.f32.gmra.mxu0 %v641
        %v643 = vpop.f32.mrf.mxu0
        %v644 = vadd.f32 %v519, %v643
        %v645 = vpop.f32.mrf.mxu0
        %646 = vdwg.mxu0
        %647 = vmatprep.subr.mxu0 0.0
        %648 = vmatpush1.msra.mxu0 0.0
        %649 = vmatprep.subr.mxu0 0.0
        %650 = vmatpush1.msra.mxu0 0.0
        %651 = vmatprep.subr.mxu0 0.0
        %652 = vmatpush1.msra.mxu0 0.0
        %653 = vmatprep.subr.mxu0 0.0
        %654 = vmatpush1.msra.mxu0 0.0
        %655 = vmatprep.subr.mxu0 0.0
        %656 = vmatpush1.msra.mxu0 0.0
        %657 = vmatprep.subr.mxu0 0.0
        %658 = vmatpush1.msra.mxu0 0.0
        %659 = vmatprep.subr.mxu0 0.0
        %660 = vmatpush1.msra.mxu0 0.0
        %661 = vmatprep.subr.mxu0 0.0
        %662 = vmatpush1.msra.mxu0 0.0
        %663 = vmatprep.subr.mxu0 0.0
        %664 = vmatpush1.msra.mxu0 0.0
        %665 = vmatprep.subr.mxu0 0.0
        %666 = vmatpush1.msra.mxu0 0.0
        %667 = vmatprep.subr.mxu0 0.0
        %668 = vmatpush1.msra.mxu0 0.0
        %669 = vmatprep.subr.mxu0 0.0
        %670 = vmatpush1.msra.mxu0 0.0
        %671 = vmatprep.subr.mxu0 0.0
        %672 = vmatpush1.msra.mxu0 0.0
        %673 = vmatprep.subr.mxu0 0.0
        %674 = vmatpush1.msra.mxu0 0.0
        %675 = vmatprep.subr.mxu0 0.0
        %v676 = vand.u32 %v226, 4294901760
        %677 = vmatpush1.msra.mxu0 %v676
        %678 = vmatprep.subr.mxu0 0.0
        %v679 = vand.u32 %v225, 4294901760
        %680 = vmatpush1.msra.mxu0 %v679
        %681 = vmatprep.subr.mxu0 0.0
        %682 = vmatpush2.msra.mxu0 0.0
        %683 = vmatprep.subr.mxu0 0.0
        %684 = vmatpush2.msra.mxu0 0.0
        %685 = vmatprep.subr.mxu0 0.0
        %686 = vmatpush2.msra.mxu0 0.0
        %687 = vmatprep.subr.mxu0 0.0
        %688 = vmatpush2.msra.mxu0 0.0
        %689 = vmatprep.subr.mxu0 0.0
        %690 = vmatpush2.msra.mxu0 0.0
        %691 = vmatprep.subr.mxu0 0.0
        %692 = vmatpush2.msra.mxu0 0.0
        %693 = vmatprep.subr.mxu0 0.0
        %694 = vmatpush2.msra.mxu0 0.0
        %695 = vmatprep.subr.mxu0 0.0
        %696 = vmatpush2.msra.mxu0 0.0
        %697 = vmatprep.subr.mxu0 0.0
        %698 = vmatpush2.msra.mxu0 0.0
        %699 = vmatprep.subr.mxu0 0.0
        %700 = vmatpush2.msra.mxu0 0.0
        %701 = vmatprep.subr.mxu0 0.0
        %702 = vmatpush2.msra.mxu0 0.0
        %703 = vmatprep.subr.mxu0 0.0
        %704 = vmatpush2.msra.mxu0 0.0
        %705 = vmatprep.subr.mxu0 0.0
        %706 = vmatpush2.msra.mxu0 0.0
        %707 = vmatprep.subr.mxu0 0.0
        %708 = vmatpush2.msra.mxu0 0.0
        %709 = vmatprep.subr.mxu0 0.0
        %710 = vmatpush2.msra.mxu0 0.0
        %711 = vmatprep.subr.mxu0 0.0
        %712 = vmatpush2.msra.mxu0 0.0
        %713 = vmatprep.mubr.f32.mxu0 0.0
        %v714 = vand.u32 %v229, 4294901760
        %v715 = vsub.f32 %v229, %v714
        %v716 = vand.u32 %v715, 4294901760
        %717 = vmatmul.mubr.f32.gmra.mxu0 %v716
        %v718 = vpop.f32.mrf.mxu0
        %v719 = vadd.f32 %v595, %v718
        %v720 = vpop.f32.mrf.mxu0
        %721 = vmatprep.mubr.f32.mxu0 0.0
        %v722 = vand.u32 %v232, 4294901760
        %v723 = vsub.f32 %v232, %v722
        %v724 = vand.u32 %v723, 4294901760
        %725 = vmatmul.mubr.f32.gmra.mxu0 %v724
        %v726 = vpop.f32.mrf.mxu0
        %v727 = vadd.f32 %v602, %v726
        %v728 = vpop.f32.mrf.mxu0
        %729 = vmatprep.mubr.f32.mxu0 0.0
        %v730 = vand.u32 %v235, 4294901760
        %v731 = vsub.f32 %v235, %v730
        %v732 = vand.u32 %v731, 4294901760
        %733 = vmatmul.mubr.f32.gmra.mxu0 %v732
        %v734 = vpop.f32.mrf.mxu0
        %v735 = vadd.f32 %v609, %v734
        %v736 = vpop.f32.mrf.mxu0
        %737 = vmatprep.mubr.f32.mxu0 0.0
        %v738 = vand.u32 %v238, 4294901760
        %v739 = vsub.f32 %v238, %v738
        %v740 = vand.u32 %v739, 4294901760
        %741 = vmatmul.mubr.f32.gmra.mxu0 %v740
        %v742 = vpop.f32.mrf.mxu0
        %v743 = vadd.f32 %v616, %v742
        %v744 = vpop.f32.mrf.mxu0
        %745 = vmatprep.mubr.f32.mxu0 0.0
        %v746 = vand.u32 %v241, 4294901760
        %v747 = vsub.f32 %v241, %v746
        %v748 = vand.u32 %v747, 4294901760
        %749 = vmatmul.mubr.f32.gmra.mxu0 %v748
        %v750 = vpop.f32.mrf.mxu0
        %v751 = vadd.f32 %v623, %v750
        %v752 = vpop.f32.mrf.mxu0
        %753 = vmatprep.mubr.f32.mxu0 0.0
        %v754 = vand.u32 %v244, 4294901760
        %v755 = vsub.f32 %v244, %v754
        %v756 = vand.u32 %v755, 4294901760
        %757 = vmatmul.mubr.f32.gmra.mxu0 %v756
        %v758 = vpop.f32.mrf.mxu0
        %v759 = vadd.f32 %v630, %v758
        %v760 = vpop.f32.mrf.mxu0
        %761 = vmatprep.mubr.f32.mxu0 0.0
        %v762 = vand.u32 %v247, 4294901760
        %v763 = vsub.f32 %v247, %v762
        %v764 = vand.u32 %v763, 4294901760
        %765 = vmatmul.mubr.f32.gmra.mxu0 %v764
        %v766 = vpop.f32.mrf.mxu0
        %v767 = vadd.f32 %v637, %v766
        %v768 = vpop.f32.mrf.mxu0
        %769 = vmatprep.mubr.f32.mxu0 0.0
        %v770 = vand.u32 %v250, 4294901760
        %v771 = vsub.f32 %v250, %v770
        %v772 = vand.u32 %v771, 4294901760
        %773 = vmatmul.mubr.f32.gmra.mxu0 %v772
        %v774 = vpop.f32.mrf.mxu0
        %v775 = vadd.f32 %v644, %v774
        %v776 = vpop.f32.mrf.mxu0
        %777 = vdwg.mxu0
        %778 = vmatprep.subr.mxu0 0.0
        %779 = vmatpush1.msra.mxu0 0.0
        %780 = vmatprep.subr.mxu0 0.0
        %781 = vmatpush1.msra.mxu0 0.0
        %782 = vmatprep.subr.mxu0 0.0
        %783 = vmatpush1.msra.mxu0 0.0
        %784 = vmatprep.subr.mxu0 0.0
        %785 = vmatpush1.msra.mxu0 0.0
        %786 = vmatprep.subr.mxu0 0.0
        %787 = vmatpush1.msra.mxu0 0.0
        %788 = vmatprep.subr.mxu0 0.0
        %789 = vmatpush1.msra.mxu0 0.0
        %790 = vmatprep.subr.mxu0 0.0
        %791 = vmatpush1.msra.mxu0 0.0
        %792 = vmatprep.subr.mxu0 0.0
        %793 = vmatpush1.msra.mxu0 0.0
        %794 = vmatprep.subr.mxu0 0.0
        %795 = vmatpush1.msra.mxu0 0.0
        %796 = vmatprep.subr.mxu0 0.0
        %797 = vmatpush1.msra.mxu0 0.0
        %798 = vmatprep.subr.mxu0 0.0
        %799 = vmatpush1.msra.mxu0 0.0
        %800 = vmatprep.subr.mxu0 0.0
        %801 = vmatpush1.msra.mxu0 0.0
        %802 = vmatprep.subr.mxu0 0.0
        %803 = vmatpush1.msra.mxu0 0.0
        %804 = vmatprep.subr.mxu0 0.0
        %805 = vmatpush1.msra.mxu0 0.0
        %806 = vmatprep.subr.mxu0 0.0
        %v807 = vand.u32 %v226, 4294901760
        %v808 = vsub.f32 %v226, %v807
        %v809 = vand.u32 %v808, 4294901760
        %810 = vmatpush1.msra.mxu0 %v809
        %811 = vmatprep.subr.mxu0 0.0
        %v812 = vand.u32 %v225, 4294901760
        %v813 = vsub.f32 %v225, %v812
        %v814 = vand.u32 %v813, 4294901760
        %815 = vmatpush1.msra.mxu0 %v814
        %816 = vmatprep.subr.mxu0 0.0
        %817 = vmatpush2.msra.mxu0 0.0
        %818 = vmatprep.subr.mxu0 0.0
        %819 = vmatpush2.msra.mxu0 0.0
        %820 = vmatprep.subr.mxu0 0.0
        %821 = vmatpush2.msra.mxu0 0.0
        %822 = vmatprep.subr.mxu0 0.0
        %823 = vmatpush2.msra.mxu0 0.0
        %824 = vmatprep.subr.mxu0 0.0
        %825 = vmatpush2.msra.mxu0 0.0
        %826 = vmatprep.subr.mxu0 0.0
        %827 = vmatpush2.msra.mxu0 0.0
        %828 = vmatprep.subr.mxu0 0.0
        %829 = vmatpush2.msra.mxu0 0.0
        %830 = vmatprep.subr.mxu0 0.0
        %831 = vmatpush2.msra.mxu0 0.0
        %832 = vmatprep.subr.mxu0 0.0
        %833 = vmatpush2.msra.mxu0 0.0
        %834 = vmatprep.subr.mxu0 0.0
        %835 = vmatpush2.msra.mxu0 0.0
        %836 = vmatprep.subr.mxu0 0.0
        %837 = vmatpush2.msra.mxu0 0.0
        %838 = vmatprep.subr.mxu0 0.0
        %839 = vmatpush2.msra.mxu0 0.0
        %840 = vmatprep.subr.mxu0 0.0
        %841 = vmatpush2.msra.mxu0 0.0
        %842 = vmatprep.subr.mxu0 0.0
        %843 = vmatpush2.msra.mxu0 0.0
        %844 = vmatprep.subr.mxu0 0.0
        %845 = vmatpush2.msra.mxu0 0.0
        %846 = vmatprep.subr.mxu0 0.0
        %847 = vmatpush2.msra.mxu0 0.0
        %848 = vmatprep.mubr.f32.mxu0 0.0
        %v849 = vand.u32 %v229, 4294901760
        %850 = vmatmul.mubr.f32.gmra.mxu0 %v849
        %v851 = vpop.f32.mrf.mxu0
        %v852 = vadd.f32 %v719, %v851
        %v853 = vpop.f32.mrf.mxu0
        %854 = vmatprep.mubr.f32.mxu0 0.0
        %v855 = vand.u32 %v232, 4294901760
        %856 = vmatmul.mubr.f32.gmra.mxu0 %v855
        %v857 = vpop.f32.mrf.mxu0
        %v858 = vadd.f32 %v727, %v857
        %v859 = vpop.f32.mrf.mxu0
        %860 = vmatprep.mubr.f32.mxu0 0.0
        %v861 = vand.u32 %v235, 4294901760
        %862 = vmatmul.mubr.f32.gmra.mxu0 %v861
        %v863 = vpop.f32.mrf.mxu0
        %v864 = vadd.f32 %v735, %v863
        %v865 = vpop.f32.mrf.mxu0
        %866 = vmatprep.mubr.f32.mxu0 0.0
        %v867 = vand.u32 %v238, 4294901760
        %868 = vmatmul.mubr.f32.gmra.mxu0 %v867
        %v869 = vpop.f32.mrf.mxu0
        %v870 = vadd.f32 %v743, %v869
        %v871 = vpop.f32.mrf.mxu0
        %872 = vmatprep.mubr.f32.mxu0 0.0
        %v873 = vand.u32 %v241, 4294901760
        %874 = vmatmul.mubr.f32.gmra.mxu0 %v873
        %v875 = vpop.f32.mrf.mxu0
        %v876 = vadd.f32 %v751, %v875
        %v877 = vpop.f32.mrf.mxu0
        %878 = vmatprep.mubr.f32.mxu0 0.0
        %v879 = vand.u32 %v244, 4294901760
        %880 = vmatmul.mubr.f32.gmra.mxu0 %v879
        %v881 = vpop.f32.mrf.mxu0
        %v882 = vadd.f32 %v759, %v881
        %v883 = vpop.f32.mrf.mxu0
        %884 = vmatprep.mubr.f32.mxu0 0.0
        %v885 = vand.u32 %v247, 4294901760
        %886 = vmatmul.mubr.f32.gmra.mxu0 %v885
        %v887 = vpop.f32.mrf.mxu0
        %v888 = vadd.f32 %v767, %v887
        %v889 = vpop.f32.mrf.mxu0
        %890 = vmatprep.mubr.f32.mxu0 0.0
        %v891 = vand.u32 %v250, 4294901760
        %892 = vmatmul.mubr.f32.gmra.mxu0 %v891
        %v893 = vpop.f32.mrf.mxu0
        %v894 = vadd.f32 %v775, %v893
        %v895 = vpop.f32.mrf.mxu0
        %896 = vdwg.mxu0
        %897 = vmatprep.subr.mxu0 0.0
        %898 = vmatpush1.msra.mxu0 0.0
        %899 = vmatprep.subr.mxu0 0.0
        %900 = vmatpush1.msra.mxu0 0.0
        %901 = vmatprep.subr.mxu0 0.0
        %902 = vmatpush1.msra.mxu0 0.0
        %903 = vmatprep.subr.mxu0 0.0
        %904 = vmatpush1.msra.mxu0 0.0
        %905 = vmatprep.subr.mxu0 0.0
        %906 = vmatpush1.msra.mxu0 0.0
        %907 = vmatprep.subr.mxu0 0.0
        %908 = vmatpush1.msra.mxu0 0.0
        %909 = vmatprep.subr.mxu0 0.0
        %910 = vmatpush1.msra.mxu0 0.0
        %911 = vmatprep.subr.mxu0 0.0
        %912 = vmatpush1.msra.mxu0 0.0
        %913 = vmatprep.subr.mxu0 0.0
        %914 = vmatpush1.msra.mxu0 0.0
        %915 = vmatprep.subr.mxu0 0.0
        %916 = vmatpush1.msra.mxu0 0.0
        %917 = vmatprep.subr.mxu0 0.0
        %918 = vmatpush1.msra.mxu0 0.0
        %919 = vmatprep.subr.mxu0 0.0
        %920 = vmatpush1.msra.mxu0 0.0
        %921 = vmatprep.subr.mxu0 0.0
        %922 = vmatpush1.msra.mxu0 0.0
        %923 = vmatprep.subr.mxu0 0.0
        %924 = vmatpush1.msra.mxu0 0.0
        %925 = vmatprep.subr.mxu0 0.0
        %v926 = vand.u32 %v226, 4294901760
        %927 = vmatpush1.msra.mxu0 %v926
        %928 = vmatprep.subr.mxu0 0.0
        %v929 = vand.u32 %v225, 4294901760
        %930 = vmatpush1.msra.mxu0 %v929
        %931 = vmatprep.subr.mxu0 0.0
        %932 = vmatpush2.msra.mxu0 0.0
        %933 = vmatprep.subr.mxu0 0.0
        %934 = vmatpush2.msra.mxu0 0.0
        %935 = vmatprep.subr.mxu0 0.0
        %936 = vmatpush2.msra.mxu0 0.0
        %937 = vmatprep.subr.mxu0 0.0
        %938 = vmatpush2.msra.mxu0 0.0
        %939 = vmatprep.subr.mxu0 0.0
        %940 = vmatpush2.msra.mxu0 0.0
        %941 = vmatprep.subr.mxu0 0.0
        %942 = vmatpush2.msra.mxu0 0.0
        %943 = vmatprep.subr.mxu0 0.0
        %944 = vmatpush2.msra.mxu0 0.0
        %945 = vmatprep.subr.mxu0 0.0
        %946 = vmatpush2.msra.mxu0 0.0
        %947 = vmatprep.subr.mxu0 0.0
        %948 = vmatpush2.msra.mxu0 0.0
        %949 = vmatprep.subr.mxu0 0.0
        %950 = vmatpush2.msra.mxu0 0.0
        %951 = vmatprep.subr.mxu0 0.0
        %952 = vmatpush2.msra.mxu0 0.0
        %953 = vmatprep.subr.mxu0 0.0
        %954 = vmatpush2.msra.mxu0 0.0
        %955 = vmatprep.subr.mxu0 0.0
        %956 = vmatpush2.msra.mxu0 0.0
        %957 = vmatprep.subr.mxu0 0.0
        %958 = vmatpush2.msra.mxu0 0.0
        %959 = vmatprep.subr.mxu0 0.0
        %960 = vmatpush2.msra.mxu0 0.0
        %961 = vmatprep.subr.mxu0 0.0
        %962 = vmatpush2.msra.mxu0 0.0
        %963 = vmatprep.mubr.f32.mxu0 0.0
        %v964 = vand.u32 %v229, 4294901760
        %965 = vmatmul.mubr.f32.gmra.mxu0 %v964
        %v966 = vpop.f32.mrf.mxu0
        %v967 = vadd.f32 %v852, %v966
        %v968 = vpop.f32.mrf.mxu0
        %969 = vmatprep.mubr.f32.mxu0 0.0
        %v970 = vand.u32 %v232, 4294901760
        %971 = vmatmul.mubr.f32.gmra.mxu0 %v970
        %v972 = vpop.f32.mrf.mxu0
        %v973 = vadd.f32 %v858, %v972
        %v974 = vpop.f32.mrf.mxu0
        %975 = vmatprep.mubr.f32.mxu0 0.0
        %v976 = vand.u32 %v235, 4294901760
        %977 = vmatmul.mubr.f32.gmra.mxu0 %v976
        %v978 = vpop.f32.mrf.mxu0
        %v979 = vadd.f32 %v864, %v978
        %v980 = vpop.f32.mrf.mxu0
        %981 = vmatprep.mubr.f32.mxu0 0.0
        %v982 = vand.u32 %v238, 4294901760
        %983 = vmatmul.mubr.f32.gmra.mxu0 %v982
        %v984 = vpop.f32.mrf.mxu0
        %v985 = vadd.f32 %v870, %v984
        %v986 = vpop.f32.mrf.mxu0
        %987 = vmatprep.mubr.f32.mxu0 0.0
        %v988 = vand.u32 %v241, 4294901760
        %989 = vmatmul.mubr.f32.gmra.mxu0 %v988
        %v990 = vpop.f32.mrf.mxu0
        %v991 = vadd.f32 %v876, %v990
        %v992 = vpop.f32.mrf.mxu0
        %993 = vmatprep.mubr.f32.mxu0 0.0
        %v994 = vand.u32 %v244, 4294901760
        %995 = vmatmul.mubr.f32.gmra.mxu0 %v994
        %v996 = vpop.f32.mrf.mxu0
        %v997 = vadd.f32 %v882, %v996
        %v998 = vpop.f32.mrf.mxu0
        %999 = vmatprep.mubr.f32.mxu0 0.0
        %v1000 = vand.u32 %v247, 4294901760
        %1001 = vmatmul.mubr.f32.gmra.mxu0 %v1000
        %v1002 = vpop.f32.mrf.mxu0
        %v1003 = vadd.f32 %v888, %v1002
        %v1004 = vpop.f32.mrf.mxu0
        %1005 = vmatprep.mubr.f32.mxu0 0.0
        %v1006 = vand.u32 %v250, 4294901760
        %1007 = vmatmul.mubr.f32.gmra.mxu0 %v1006
        %v1008 = vpop.f32.mrf.mxu0
        %v1009 = vadd.f32 %v894, %v1008
        %v1010 = vpop.f32.mrf.mxu0
        %1011 = vdwg.mxu0
        %v1012 = vcombine.low %v967, %v991
        %v1013 = vcombine.high %v967, %v991
        %v1015 = vunpack.c.l.s4 1983009808
        %v1016 = vunpack.c.0.s8 %v1015
        %v1017 = vlaneseq
        %v1018 = vshrl.u32 %v1017, 7
        %v1019 = vsub.s32 %v1016, %v1018
        %v1020 = vrot.slane %v1012, %v1019
        %v1022 = vunpack.c.l.s4 1983009808
        %v1023 = vunpack.c.0.s8 %v1022
        %v1024 = vlaneseq
        %v1025 = vshrl.u32 %v1024, 7
        %v1026 = vsub.s32 %v1023, %v1025
        %v1027 = vrot.slane %v1013, %v1026
        %v1028 = vcombine.low %v979, %v1003
        %v1029 = vcombine.high %v979, %v1003
        %v1031 = vunpack.c.l.s4 1983009808
        %v1032 = vunpack.c.0.s8 %v1031
        %v1033 = vlaneseq
        %v1034 = vshrl.u32 %v1033, 7
        %v1035 = vsub.s32 %v1032, %v1034
        %v1036 = vrot.slane %v1028, %v1035
        %v1038 = vunpack.c.l.s4 1983009808
        %v1039 = vunpack.c.0.s8 %v1038
        %v1040 = vlaneseq
        %v1041 = vshrl.u32 %v1040, 7
        %v1042 = vsub.s32 %v1039, %v1041
        %v1043 = vrot.slane %v1029, %v1042
        %v1044 = vcombine.low %v1020, %v1036
        %v1045 = vcombine.high %v1020, %v1036
        %v1047 = vunpack.c.l.s4 1934713408
        %v1048 = vunpack.c.0.s8 %v1047
        %v1049 = vlaneseq
        %v1050 = vshrl.u32 %v1049, 7
        %v1051 = vsub.s32 %v1048, %v1050
        %v1052 = vrot.slane %v1044, %v1051
        %v1054 = vunpack.c.l.s4 1934713408
        %v1055 = vunpack.c.0.s8 %v1054
        %v1056 = vlaneseq
        %v1057 = vshrl.u32 %v1056, 7
        %v1058 = vsub.s32 %v1055, %v1057
        %v1059 = vrot.slane %v1045, %v1058
        %v1060 = vcombine.low %v1027, %v1043
        %v1061 = vcombine.high %v1027, %v1043
        %v1063 = vunpack.c.l.s4 1934713408
        %v1064 = vunpack.c.0.s8 %v1063
        %v1065 = vlaneseq
        %v1066 = vshrl.u32 %v1065, 7
        %v1067 = vsub.s32 %v1064, %v1066
        %v1068 = vrot.slane %v1060, %v1067
        %v1070 = vunpack.c.l.s4 1934713408
        %v1071 = vunpack.c.0.s8 %v1070
        %v1072 = vlaneseq
        %v1073 = vshrl.u32 %v1072, 7
        %v1074 = vsub.s32 %v1071, %v1073
        %v1075 = vrot.slane %v1061, %v1074
        %v1076 = vcombine.high %v1052, 0.0
        %v1077 = vcombine.high %v1059, 0.0
        %v1078 = vcombine.high %v1068, 0.0
        %v1079 = vcombine.high %v1075, 0.0
        %v1080 = vcombine.low %v973, %v997
        %v1081 = vcombine.high %v973, %v997
        %v1083 = vunpack.c.l.s4 1983009808
        %v1084 = vunpack.c.0.s8 %v1083
        %v1085 = vlaneseq
        %v1086 = vshrl.u32 %v1085, 7
        %v1087 = vsub.s32 %v1084, %v1086
        %v1088 = vrot.slane %v1080, %v1087
        %v1090 = vunpack.c.l.s4 1983009808
        %v1091 = vunpack.c.0.s8 %v1090
        %v1092 = vlaneseq
        %v1093 = vshrl.u32 %v1092, 7
        %v1094 = vsub.s32 %v1091, %v1093
        %v1095 = vrot.slane %v1081, %v1094
        %v1096 = vcombine.low %v985, %v1009
        %v1097 = vcombine.high %v985, %v1009
        %v1099 = vunpack.c.l.s4 1983009808
        %v1100 = vunpack.c.0.s8 %v1099
        %v1101 = vlaneseq
        %v1102 = vshrl.u32 %v1101, 7
        %v1103 = vsub.s32 %v1100, %v1102
        %v1104 = vrot.slane %v1096, %v1103
        %v1106 = vunpack.c.l.s4 1983009808
        %v1107 = vunpack.c.0.s8 %v1106
        %v1108 = vlaneseq
        %v1109 = vshrl.u32 %v1108, 7
        %v1110 = vsub.s32 %v1107, %v1109
        %v1111 = vrot.slane %v1097, %v1110
        %v1112 = vcombine.low %v1088, %v1104
        %v1113 = vcombine.high %v1088, %v1104
        %v1115 = vunpack.c.l.s4 1934713408
        %v1116 = vunpack.c.0.s8 %v1115
        %v1117 = vlaneseq
        %v1118 = vshrl.u32 %v1117, 7
        %v1119 = vsub.s32 %v1116, %v1118
        %v1120 = vrot.slane %v1112, %v1119
        %v1122 = vunpack.c.l.s4 1934713408
        %v1123 = vunpack.c.0.s8 %v1122
        %v1124 = vlaneseq
        %v1125 = vshrl.u32 %v1124, 7
        %v1126 = vsub.s32 %v1123, %v1125
        %v1127 = vrot.slane %v1113, %v1126
        %v1128 = vcombine.low %v1095, %v1111
        %v1129 = vcombine.high %v1095, %v1111
        %v1131 = vunpack.c.l.s4 1934713408
        %v1132 = vunpack.c.0.s8 %v1131
        %v1133 = vlaneseq
        %v1134 = vshrl.u32 %v1133, 7
        %v1135 = vsub.s32 %v1132, %v1134
        %v1136 = vrot.slane %v1128, %v1135
        %v1138 = vunpack.c.l.s4 1934713408
        %v1139 = vunpack.c.0.s8 %v1138
        %v1140 = vlaneseq
        %v1141 = vshrl.u32 %v1140, 7
        %v1142 = vsub.s32 %v1139, %v1141
        %v1143 = vrot.slane %v1129, %v1142
        %v1144 = vcombine.high %v1120, 0.0
        %v1145 = vcombine.high %v1127, 0.0
        %v1146 = vcombine.high %v1136, 0.0
        %v1147 = vcombine.high %v1143, 0.0
        %v1148 = vcombine.low %v1052, %v1059
        %v1150 = vunpack.c.l.s4 1983009808
        %v1151 = vunpack.c.0.s8 %v1150
        %v1152 = vlaneseq
        %v1153 = vshrl.u32 %v1152, 7
        %v1154 = vsub.s32 %v1151, %v1153
        %v1155 = vrot.slane %v1148, %v1154
        %v1156 = vcombine.low %v1076, %v1077
        %v1158 = vunpack.c.l.s4 1983009808
        %v1159 = vunpack.c.0.s8 %v1158
        %v1160 = vlaneseq
        %v1161 = vshrl.u32 %v1160, 7
        %v1162 = vsub.s32 %v1159, %v1161
        %v1163 = vrot.slane %v1156, %v1162
        %v1164 = vcombine.low %v1068, %v1075
        %v1166 = vunpack.c.l.s4 1983009808
        %v1167 = vunpack.c.0.s8 %v1166
        %v1168 = vlaneseq
        %v1169 = vshrl.u32 %v1168, 7
        %v1170 = vsub.s32 %v1167, %v1169
        %v1171 = vrot.slane %v1164, %v1170
        %v1172 = vcombine.low %v1078, %v1079
        %v1174 = vunpack.c.l.s4 1983009808
        %v1175 = vunpack.c.0.s8 %v1174
        %v1176 = vlaneseq
        %v1177 = vshrl.u32 %v1176, 7
        %v1178 = vsub.s32 %v1175, %v1177
        %v1179 = vrot.slane %v1172, %v1178
        %v1180 = vcombine.low %v1155, %v1163
        %v1181 = vcombine.high %v1155, %v1163
        %v1183 = vunpack.c.l.s4 1934713408
        %v1184 = vunpack.c.0.s8 %v1183
        %v1185 = vlaneseq
        %v1186 = vshrl.u32 %v1185, 7
        %v1187 = vsub.s32 %v1184, %v1186
        %v1188 = vrot.slane %v1180, %v1187
        %v1190 = vunpack.c.l.s4 1934713408
        %v1191 = vunpack.c.0.s8 %v1190
        %v1192 = vlaneseq
        %v1193 = vshrl.u32 %v1192, 7
        %v1194 = vsub.s32 %v1191, %v1193
        %v1195 = vrot.slane %v1181, %v1194
        %v1196 = vcombine.low %v1171, %v1179
        %v1197 = vcombine.high %v1171, %v1179
        %v1199 = vunpack.c.l.s4 1934713408
        %v1200 = vunpack.c.0.s8 %v1199
        %v1201 = vlaneseq
        %v1202 = vshrl.u32 %v1201, 7
        %v1203 = vsub.s32 %v1200, %v1202
        %v1204 = vrot.slane %v1196, %v1203
        %v1206 = vunpack.c.l.s4 1934713408
        %v1207 = vunpack.c.0.s8 %v1206
        %v1208 = vlaneseq
        %v1209 = vshrl.u32 %v1208, 7
        %v1210 = vsub.s32 %v1207, %v1209
        %v1211 = vrot.slane %v1197, %v1210
        %v1212 = vcombine.low %v1188, %v1204
        %v1213 = vcombine.high %v1188, %v1204
        %v1214 = vcombine.low %v1195, %v1211
        %v1215 = vcombine.high %v1195, %v1211
        %v1216 = vcombine.low %v1120, %v1127
        %v1218 = vunpack.c.l.s4 1983009808
        %v1219 = vunpack.c.0.s8 %v1218
        %v1220 = vlaneseq
        %v1221 = vshrl.u32 %v1220, 7
        %v1222 = vsub.s32 %v1219, %v1221
        %v1223 = vrot.slane %v1216, %v1222
        %v1224 = vcombine.low %v1144, %v1145
        %v1226 = vunpack.c.l.s4 1983009808
        %v1227 = vunpack.c.0.s8 %v1226
        %v1228 = vlaneseq
        %v1229 = vshrl.u32 %v1228, 7
        %v1230 = vsub.s32 %v1227, %v1229
        %v1231 = vrot.slane %v1224, %v1230
        %v1232 = vcombine.low %v1136, %v1143
        %v1234 = vunpack.c.l.s4 1983009808
        %v1235 = vunpack.c.0.s8 %v1234
        %v1236 = vlaneseq
        %v1237 = vshrl.u32 %v1236, 7
        %v1238 = vsub.s32 %v1235, %v1237
        %v1239 = vrot.slane %v1232, %v1238
        %v1240 = vcombine.low %v1146, %v1147
        %v1242 = vunpack.c.l.s4 1983009808
        %v1243 = vunpack.c.0.s8 %v1242
        %v1244 = vlaneseq
        %v1245 = vshrl.u32 %v1244, 7
        %v1246 = vsub.s32 %v1243, %v1245
        %v1247 = vrot.slane %v1240, %v1246
        %v1248 = vcombine.low %v1223, %v1231
        %v1249 = vcombine.high %v1223, %v1231
        %v1251 = vunpack.c.l.s4 1934713408
        %v1252 = vunpack.c.0.s8 %v1251
        %v1253 = vlaneseq
        %v1254 = vshrl.u32 %v1253, 7
        %v1255 = vsub.s32 %v1252, %v1254
        %v1256 = vrot.slane %v1248, %v1255
        %v1258 = vunpack.c.l.s4 1934713408
        %v1259 = vunpack.c.0.s8 %v1258
        %v1260 = vlaneseq
        %v1261 = vshrl.u32 %v1260, 7
        %v1262 = vsub.s32 %v1259, %v1261
        %v1263 = vrot.slane %v1249, %v1262
        %v1264 = vcombine.low %v1239, %v1247
        %v1265 = vcombine.high %v1239, %v1247
        %v1267 = vunpack.c.l.s4 1934713408
        %v1268 = vunpack.c.0.s8 %v1267
        %v1269 = vlaneseq
        %v1270 = vshrl.u32 %v1269, 7
        %v1271 = vsub.s32 %v1268, %v1270
        %v1272 = vrot.slane %v1264, %v1271
        %v1274 = vunpack.c.l.s4 1934713408
        %v1275 = vunpack.c.0.s8 %v1274
        %v1276 = vlaneseq
        %v1277 = vshrl.u32 %v1276, 7
        %v1278 = vsub.s32 %v1275, %v1277
        %v1279 = vrot.slane %v1265, %v1278
        %v1280 = vcombine.low %v1256, %v1272
        %v1281 = vcombine.high %v1256, %v1272
        %v1282 = vcombine.low %v1263, %v1279
        %v1283 = vcombine.high %v1263, %v1279
        %v1284 = vld [vmem:[#allocation5] sm:$0xff]
        %v1286 = vsel %vm227, %v1284, 0
        %1288 = vmatprep.subr.mxu0 0.0
        %1289 = vmatpush1.msra.mxu0 0.0
        %1290 = vmatprep.subr.mxu0 0.0
        %1291 = vmatpush1.msra.mxu0 0.0
        %1292 = vmatprep.subr.mxu0 0.0
        %1293 = vmatpush1.msra.mxu0 0.0
        %1294 = vmatprep.subr.mxu0 0.0
        %1295 = vmatpush1.msra.mxu0 0.0
        %1296 = vmatprep.subr.mxu0 0.0
        %1297 = vmatpush1.msra.mxu0 0.0
        %1298 = vmatprep.subr.mxu0 0.0
        %1299 = vmatpush1.msra.mxu0 0.0
        %1300 = vmatprep.subr.mxu0 0.0
        %1301 = vmatpush1.msra.mxu0 0.0
        %1302 = vmatprep.subr.mxu0 0.0
        %1303 = vmatpush1.msra.mxu0 0.0
        %1304 = vmatprep.subr.mxu0 0.0
        %1305 = vmatpush1.msra.mxu0 0.0
        %1306 = vmatprep.subr.mxu0 0.0
        %1307 = vmatpush1.msra.mxu0 0.0
        %1308 = vmatprep.subr.mxu0 0.0
        %1309 = vmatpush1.msra.mxu0 0.0
        %1310 = vmatprep.subr.mxu0 0.0
        %1311 = vmatpush1.msra.mxu0 0.0
        %1312 = vmatprep.subr.mxu0 0.0
        %1313 = vmatpush1.msra.mxu0 0.0
        %1314 = vmatprep.subr.mxu0 0.0
        %1315 = vmatpush1.msra.mxu0 0.0
        %v1316 = vand.u32 %v1281, 4294901760
        %1317 = vmatprep.subr.mxu0 %v1316
        %v1318 = vand.u32 %v1280, 4294901760
        %1319 = vmatpush1.msra.mxu0 %v1318
        %v1320 = vand.u32 %v1213, 4294901760
        %1321 = vmatprep.subr.mxu0 %v1320
        %v1322 = vand.u32 %v1212, 4294901760
        %1323 = vmatpush1.msra.mxu0 %v1322
        %1324 = vmatprep.subr.mxu0 0.0
        %1325 = vmatpush2.msra.mxu0 0.0
        %1326 = vmatprep.subr.mxu0 0.0
        %1327 = vmatpush2.msra.mxu0 0.0
        %1328 = vmatprep.subr.mxu0 0.0
        %1329 = vmatpush2.msra.mxu0 0.0
        %1330 = vmatprep.subr.mxu0 0.0
        %1331 = vmatpush2.msra.mxu0 0.0
        %1332 = vmatprep.subr.mxu0 0.0
        %1333 = vmatpush2.msra.mxu0 0.0
        %1334 = vmatprep.subr.mxu0 0.0
        %1335 = vmatpush2.msra.mxu0 0.0
        %1336 = vmatprep.subr.mxu0 0.0
        %1337 = vmatpush2.msra.mxu0 0.0
        %1338 = vmatprep.subr.mxu0 0.0
        %1339 = vmatpush2.msra.mxu0 0.0
        %1340 = vmatprep.subr.mxu0 0.0
        %1341 = vmatpush2.msra.mxu0 0.0
        %1342 = vmatprep.subr.mxu0 0.0
        %1343 = vmatpush2.msra.mxu0 0.0
        %1344 = vmatprep.subr.mxu0 0.0
        %1345 = vmatpush2.msra.mxu0 0.0
        %1346 = vmatprep.subr.mxu0 0.0
        %1347 = vmatpush2.msra.mxu0 0.0
        %1348 = vmatprep.subr.mxu0 0.0
        %1349 = vmatpush2.msra.mxu0 0.0
        %1350 = vmatprep.subr.mxu0 0.0
        %1351 = vmatpush2.msra.mxu0 0.0
        %1352 = vmatprep.subr.mxu0 0.0
        %1353 = vmatpush2.msra.mxu0 0.0
        %1354 = vmatprep.subr.mxu0 0.0
        %1355 = vmatpush2.msra.mxu0 0.0
        %1356 = vmatprep.mubr.f32.mxu0 0.0
        %v1357 = vand.u32 %v1286, 4294901760
        %v1358 = vsub.f32 %v1286, %v1357
        %v1359 = vand.u32 %v1358, 4294901760
        %v1360 = vsub.f32 %v1358, %v1359
        %v1361 = vand.u32 %v1360, 4294901760
        %1362 = vmatmul.mubr.f32.gmra.mxu0 %v1361
        %v1363 = vpop.f32.mrf.mxu0
        %v1364 = vadd.f32 0.0, %v1363
        %v1365 = vpop.f32.mrf.mxu0
        %v1366 = vadd.f32 0.0, %v1365
        %1367 = vdwg.mxu0
        %1368 = vmatprep.subr.mxu0 0.0
        %1369 = vmatpush1.msra.mxu0 0.0
        %1370 = vmatprep.subr.mxu0 0.0
        %1371 = vmatpush1.msra.mxu0 0.0
        %1372 = vmatprep.subr.mxu0 0.0
        %1373 = vmatpush1.msra.mxu0 0.0
        %1374 = vmatprep.subr.mxu0 0.0
        %1375 = vmatpush1.msra.mxu0 0.0
        %1376 = vmatprep.subr.mxu0 0.0
        %1377 = vmatpush1.msra.mxu0 0.0
        %1378 = vmatprep.subr.mxu0 0.0
        %1379 = vmatpush1.msra.mxu0 0.0
        %1380 = vmatprep.subr.mxu0 0.0
        %1381 = vmatpush1.msra.mxu0 0.0
        %1382 = vmatprep.subr.mxu0 0.0
        %1383 = vmatpush1.msra.mxu0 0.0
        %1384 = vmatprep.subr.mxu0 0.0
        %1385 = vmatpush1.msra.mxu0 0.0
        %1386 = vmatprep.subr.mxu0 0.0
        %1387 = vmatpush1.msra.mxu0 0.0
        %1388 = vmatprep.subr.mxu0 0.0
        %1389 = vmatpush1.msra.mxu0 0.0
        %1390 = vmatprep.subr.mxu0 0.0
        %1391 = vmatpush1.msra.mxu0 0.0
        %1392 = vmatprep.subr.mxu0 0.0
        %1393 = vmatpush1.msra.mxu0 0.0
        %1394 = vmatprep.subr.mxu0 0.0
        %1395 = vmatpush1.msra.mxu0 0.0
        %v1396 = vand.u32 %v1281, 4294901760
        %v1397 = vsub.f32 %v1281, %v1396
        %v1398 = vand.u32 %v1397, 4294901760
        %v1399 = vsub.f32 %v1397, %v1398
        %v1400 = vand.u32 %v1399, 4294901760
        %1401 = vmatprep.subr.mxu0 %v1400
        %v1402 = vand.u32 %v1280, 4294901760
        %v1403 = vsub.f32 %v1280, %v1402
        %v1404 = vand.u32 %v1403, 4294901760
        %v1405 = vsub.f32 %v1403, %v1404
        %v1406 = vand.u32 %v1405, 4294901760
        %1407 = vmatpush1.msra.mxu0 %v1406
        %v1408 = vand.u32 %v1213, 4294901760
        %v1409 = vsub.f32 %v1213, %v1408
        %v1410 = vand.u32 %v1409, 4294901760
        %v1411 = vsub.f32 %v1409, %v1410
        %v1412 = vand.u32 %v1411, 4294901760
        %1413 = vmatprep.subr.mxu0 %v1412
        %v1414 = vand.u32 %v1212, 4294901760
        %v1415 = vsub.f32 %v1212, %v1414
        %v1416 = vand.u32 %v1415, 4294901760
        %v1417 = vsub.f32 %v1415, %v1416
        %v1418 = vand.u32 %v1417, 4294901760
        %1419 = vmatpush1.msra.mxu0 %v1418
        %1420 = vmatprep.subr.mxu0 0.0
        %1421 = vmatpush2.msra.mxu0 0.0
        %1422 = vmatprep.subr.mxu0 0.0
        %1423 = vmatpush2.msra.mxu0 0.0
        %1424 = vmatprep.subr.mxu0 0.0
        %1425 = vmatpush2.msra.mxu0 0.0
        %1426 = vmatprep.subr.mxu0 0.0
        %1427 = vmatpush2.msra.mxu0 0.0
        %1428 = vmatprep.subr.mxu0 0.0
        %1429 = vmatpush2.msra.mxu0 0.0
        %1430 = vmatprep.subr.mxu0 0.0
        %1431 = vmatpush2.msra.mxu0 0.0
        %1432 = vmatprep.subr.mxu0 0.0
        %1433 = vmatpush2.msra.mxu0 0.0
        %1434 = vmatprep.subr.mxu0 0.0
        %1435 = vmatpush2.msra.mxu0 0.0
        %1436 = vmatprep.subr.mxu0 0.0
        %1437 = vmatpush2.msra.mxu0 0.0
        %1438 = vmatprep.subr.mxu0 0.0
        %1439 = vmatpush2.msra.mxu0 0.0
        %1440 = vmatprep.subr.mxu0 0.0
        %1441 = vmatpush2.msra.mxu0 0.0
        %1442 = vmatprep.subr.mxu0 0.0
        %1443 = vmatpush2.msra.mxu0 0.0
        %1444 = vmatprep.subr.mxu0 0.0
        %1445 = vmatpush2.msra.mxu0 0.0
        %1446 = vmatprep.subr.mxu0 0.0
        %1447 = vmatpush2.msra.mxu0 0.0
        %1448 = vmatprep.subr.mxu0 0.0
        %1449 = vmatpush2.msra.mxu0 0.0
        %1450 = vmatprep.subr.mxu0 0.0
        %1451 = vmatpush2.msra.mxu0 0.0
        %1452 = vmatprep.mubr.f32.mxu0 0.0
        %v1453 = vand.u32 %v1286, 4294901760
        %1454 = vmatmul.mubr.f32.gmra.mxu0 %v1453
        %v1455 = vpop.f32.mrf.mxu0
        %v1456 = vadd.f32 %v1364, %v1455
        %v1457 = vpop.f32.mrf.mxu0
        %v1458 = vadd.f32 %v1366, %v1457
        %1459 = vdwg.mxu0
        %1460 = vmatprep.subr.mxu0 0.0
        %1461 = vmatpush1.msra.mxu0 0.0
        %1462 = vmatprep.subr.mxu0 0.0
        %1463 = vmatpush1.msra.mxu0 0.0
        %1464 = vmatprep.subr.mxu0 0.0
        %1465 = vmatpush1.msra.mxu0 0.0
        %1466 = vmatprep.subr.mxu0 0.0
        %1467 = vmatpush1.msra.mxu0 0.0
        %1468 = vmatprep.subr.mxu0 0.0
        %1469 = vmatpush1.msra.mxu0 0.0
        %1470 = vmatprep.subr.mxu0 0.0
        %1471 = vmatpush1.msra.mxu0 0.0
        %1472 = vmatprep.subr.mxu0 0.0
        %1473 = vmatpush1.msra.mxu0 0.0
        %1474 = vmatprep.subr.mxu0 0.0
        %1475 = vmatpush1.msra.mxu0 0.0
        %1476 = vmatprep.subr.mxu0 0.0
        %1477 = vmatpush1.msra.mxu0 0.0
        %1478 = vmatprep.subr.mxu0 0.0
        %1479 = vmatpush1.msra.mxu0 0.0
        %1480 = vmatprep.subr.mxu0 0.0
        %1481 = vmatpush1.msra.mxu0 0.0
        %1482 = vmatprep.subr.mxu0 0.0
        %1483 = vmatpush1.msra.mxu0 0.0
        %1484 = vmatprep.subr.mxu0 0.0
        %1485 = vmatpush1.msra.mxu0 0.0
        %1486 = vmatprep.subr.mxu0 0.0
        %1487 = vmatpush1.msra.mxu0 0.0
        %v1488 = vand.u32 %v1281, 4294901760
        %v1489 = vsub.f32 %v1281, %v1488
        %1490 = vmatprep.subr.mxu0 %v1489
        %v1491 = vand.u32 %v1280, 4294901760
        %v1492 = vsub.f32 %v1280, %v1491
        %1493 = vmatpush1.msra.mxu0 %v1492
        %v1494 = vand.u32 %v1213, 4294901760
        %v1495 = vsub.f32 %v1213, %v1494
        %1496 = vmatprep.subr.mxu0 %v1495
        %v1497 = vand.u32 %v1212, 4294901760
        %v1498 = vsub.f32 %v1212, %v1497
        %1499 = vmatpush1.msra.mxu0 %v1498
        %1500 = vmatprep.subr.mxu0 0.0
        %1501 = vmatpush2.msra.mxu0 0.0
        %1502 = vmatprep.subr.mxu0 0.0
        %1503 = vmatpush2.msra.mxu0 0.0
        %1504 = vmatprep.subr.mxu0 0.0
        %1505 = vmatpush2.msra.mxu0 0.0
        %1506 = vmatprep.subr.mxu0 0.0
        %1507 = vmatpush2.msra.mxu0 0.0
        %1508 = vmatprep.subr.mxu0 0.0
        %1509 = vmatpush2.msra.mxu0 0.0
        %1510 = vmatprep.subr.mxu0 0.0
        %1511 = vmatpush2.msra.mxu0 0.0
        %1512 = vmatprep.subr.mxu0 0.0
        %1513 = vmatpush2.msra.mxu0 0.0
        %1514 = vmatprep.subr.mxu0 0.0
        %1515 = vmatpush2.msra.mxu0 0.0
        %1516 = vmatprep.subr.mxu0 0.0
        %1517 = vmatpush2.msra.mxu0 0.0
        %1518 = vmatprep.subr.mxu0 0.0
        %1519 = vmatpush2.msra.mxu0 0.0
        %1520 = vmatprep.subr.mxu0 0.0
        %1521 = vmatpush2.msra.mxu0 0.0
        %1522 = vmatprep.subr.mxu0 0.0
        %1523 = vmatpush2.msra.mxu0 0.0
        %1524 = vmatprep.subr.mxu0 0.0
        %1525 = vmatpush2.msra.mxu0 0.0
        %1526 = vmatprep.subr.mxu0 0.0
        %1527 = vmatpush2.msra.mxu0 0.0
        %1528 = vmatprep.subr.mxu0 0.0
        %1529 = vmatpush2.msra.mxu0 0.0
        %1530 = vmatprep.subr.mxu0 0.0
        %1531 = vmatpush2.msra.mxu0 0.0
        %1532 = vmatprep.mubr.f32.mxu0 0.0
        %v1533 = vand.u32 %v1286, 4294901760
        %v1534 = vsub.f32 %v1286, %v1533
        %1535 = vmatmul.mubr.f32.gmra.mxu0 %v1534
        %v1536 = vpop.f32.mrf.mxu0
        %v1537 = vadd.f32 %v1456, %v1536
        %v1538 = vpop.f32.mrf.mxu0
        %v1539 = vadd.f32 %v1458, %v1538
        %1540 = vdwg.mxu0
        %1541 = vmatprep.subr.mxu0 0.0
        %1542 = vmatpush1.msra.mxu0 0.0
        %1543 = vmatprep.subr.mxu0 0.0
        %1544 = vmatpush1.msra.mxu0 0.0
        %1545 = vmatprep.subr.mxu0 0.0
        %1546 = vmatpush1.msra.mxu0 0.0
        %1547 = vmatprep.subr.mxu0 0.0
        %1548 = vmatpush1.msra.mxu0 0.0
        %1549 = vmatprep.subr.mxu0 0.0
        %1550 = vmatpush1.msra.mxu0 0.0
        %1551 = vmatprep.subr.mxu0 0.0
        %1552 = vmatpush1.msra.mxu0 0.0
        %1553 = vmatprep.subr.mxu0 0.0
        %1554 = vmatpush1.msra.mxu0 0.0
        %1555 = vmatprep.subr.mxu0 0.0
        %1556 = vmatpush1.msra.mxu0 0.0
        %1557 = vmatprep.subr.mxu0 0.0
        %1558 = vmatpush1.msra.mxu0 0.0
        %1559 = vmatprep.subr.mxu0 0.0
        %1560 = vmatpush1.msra.mxu0 0.0
        %1561 = vmatprep.subr.mxu0 0.0
        %1562 = vmatpush1.msra.mxu0 0.0
        %1563 = vmatprep.subr.mxu0 0.0
        %1564 = vmatpush1.msra.mxu0 0.0
        %1565 = vmatprep.subr.mxu0 0.0
        %1566 = vmatpush1.msra.mxu0 0.0
        %1567 = vmatprep.subr.mxu0 0.0
        %1568 = vmatpush1.msra.mxu0 0.0
        %v1569 = vand.u32 %v1281, 4294901760
        %1570 = vmatprep.subr.mxu0 %v1569
        %v1571 = vand.u32 %v1280, 4294901760
        %1572 = vmatpush1.msra.mxu0 %v1571
        %v1573 = vand.u32 %v1213, 4294901760
        %1574 = vmatprep.subr.mxu0 %v1573
        %v1575 = vand.u32 %v1212, 4294901760
        %1576 = vmatpush1.msra.mxu0 %v1575
        %1577 = vmatprep.subr.mxu0 0.0
        %1578 = vmatpush2.msra.mxu0 0.0
        %1579 = vmatprep.subr.mxu0 0.0
        %1580 = vmatpush2.msra.mxu0 0.0
        %1581 = vmatprep.subr.mxu0 0.0
        %1582 = vmatpush2.msra.mxu0 0.0
        %1583 = vmatprep.subr.mxu0 0.0
        %1584 = vmatpush2.msra.mxu0 0.0
        %1585 = vmatprep.subr.mxu0 0.0
        %1586 = vmatpush2.msra.mxu0 0.0
        %1587 = vmatprep.subr.mxu0 0.0
        %1588 = vmatpush2.msra.mxu0 0.0
        %1589 = vmatprep.subr.mxu0 0.0
        %1590 = vmatpush2.msra.mxu0 0.0
        %1591 = vmatprep.subr.mxu0 0.0
        %1592 = vmatpush2.msra.mxu0 0.0
        %1593 = vmatprep.subr.mxu0 0.0
        %1594 = vmatpush2.msra.mxu0 0.0
        %1595 = vmatprep.subr.mxu0 0.0
        %1596 = vmatpush2.msra.mxu0 0.0
        %1597 = vmatprep.subr.mxu0 0.0
        %1598 = vmatpush2.msra.mxu0 0.0
        %1599 = vmatprep.subr.mxu0 0.0
        %1600 = vmatpush2.msra.mxu0 0.0
        %1601 = vmatprep.subr.mxu0 0.0
        %1602 = vmatpush2.msra.mxu0 0.0
        %1603 = vmatprep.subr.mxu0 0.0
        %1604 = vmatpush2.msra.mxu0 0.0
        %1605 = vmatprep.subr.mxu0 0.0
        %1606 = vmatpush2.msra.mxu0 0.0
        %1607 = vmatprep.subr.mxu0 0.0
        %1608 = vmatpush2.msra.mxu0 0.0
        %1609 = vmatprep.mubr.f32.mxu0 0.0
        %v1610 = vand.u32 %v1286, 4294901760
        %v1611 = vsub.f32 %v1286, %v1610
        %v1612 = vand.u32 %v1611, 4294901760
        %1613 = vmatmul.mubr.f32.gmra.mxu0 %v1612
        %v1614 = vpop.f32.mrf.mxu0
        %v1615 = vadd.f32 %v1537, %v1614
        %v1616 = vpop.f32.mrf.mxu0
        %v1617 = vadd.f32 %v1539, %v1616
        %1618 = vdwg.mxu0
        %1619 = vmatprep.subr.mxu0 0.0
        %1620 = vmatpush1.msra.mxu0 0.0
        %1621 = vmatprep.subr.mxu0 0.0
        %1622 = vmatpush1.msra.mxu0 0.0
        %1623 = vmatprep.subr.mxu0 0.0
        %1624 = vmatpush1.msra.mxu0 0.0
        %1625 = vmatprep.subr.mxu0 0.0
        %1626 = vmatpush1.msra.mxu0 0.0
        %1627 = vmatprep.subr.mxu0 0.0
        %1628 = vmatpush1.msra.mxu0 0.0
        %1629 = vmatprep.subr.mxu0 0.0
        %1630 = vmatpush1.msra.mxu0 0.0
        %1631 = vmatprep.subr.mxu0 0.0
        %1632 = vmatpush1.msra.mxu0 0.0
        %1633 = vmatprep.subr.mxu0 0.0
        %1634 = vmatpush1.msra.mxu0 0.0
        %1635 = vmatprep.subr.mxu0 0.0
        %1636 = vmatpush1.msra.mxu0 0.0
        %1637 = vmatprep.subr.mxu0 0.0
        %1638 = vmatpush1.msra.mxu0 0.0
        %1639 = vmatprep.subr.mxu0 0.0
        %1640 = vmatpush1.msra.mxu0 0.0
        %1641 = vmatprep.subr.mxu0 0.0
        %1642 = vmatpush1.msra.mxu0 0.0
        %1643 = vmatprep.subr.mxu0 0.0
        %1644 = vmatpush1.msra.mxu0 0.0
        %1645 = vmatprep.subr.mxu0 0.0
        %1646 = vmatpush1.msra.mxu0 0.0
        %v1647 = vand.u32 %v1281, 4294901760
        %v1648 = vsub.f32 %v1281, %v1647
        %v1649 = vand.u32 %v1648, 4294901760
        %1650 = vmatprep.subr.mxu0 %v1649
        %v1651 = vand.u32 %v1280, 4294901760
        %v1652 = vsub.f32 %v1280, %v1651
        %v1653 = vand.u32 %v1652, 4294901760
        %1654 = vmatpush1.msra.mxu0 %v1653
        %v1655 = vand.u32 %v1213, 4294901760
        %v1656 = vsub.f32 %v1213, %v1655
        %v1657 = vand.u32 %v1656, 4294901760
        %1658 = vmatprep.subr.mxu0 %v1657
        %v1659 = vand.u32 %v1212, 4294901760
        %v1660 = vsub.f32 %v1212, %v1659
        %v1661 = vand.u32 %v1660, 4294901760
        %1662 = vmatpush1.msra.mxu0 %v1661
        %1663 = vmatprep.subr.mxu0 0.0
        %1664 = vmatpush2.msra.mxu0 0.0
        %1665 = vmatprep.subr.mxu0 0.0
        %1666 = vmatpush2.msra.mxu0 0.0
        %1667 = vmatprep.subr.mxu0 0.0
        %1668 = vmatpush2.msra.mxu0 0.0
        %1669 = vmatprep.subr.mxu0 0.0
        %1670 = vmatpush2.msra.mxu0 0.0
        %1671 = vmatprep.subr.mxu0 0.0
        %1672 = vmatpush2.msra.mxu0 0.0
        %1673 = vmatprep.subr.mxu0 0.0
        %1674 = vmatpush2.msra.mxu0 0.0
        %1675 = vmatprep.subr.mxu0 0.0
        %1676 = vmatpush2.msra.mxu0 0.0
        %1677 = vmatprep.subr.mxu0 0.0
        %1678 = vmatpush2.msra.mxu0 0.0
        %1679 = vmatprep.subr.mxu0 0.0
        %1680 = vmatpush2.msra.mxu0 0.0
        %1681 = vmatprep.subr.mxu0 0.0
        %1682 = vmatpush2.msra.mxu0 0.0
        %1683 = vmatprep.subr.mxu0 0.0
        %1684 = vmatpush2.msra.mxu0 0.0
        %1685 = vmatprep.subr.mxu0 0.0
        %1686 = vmatpush2.msra.mxu0 0.0
        %1687 = vmatprep.subr.mxu0 0.0
        %1688 = vmatpush2.msra.mxu0 0.0
        %1689 = vmatprep.subr.mxu0 0.0
        %1690 = vmatpush2.msra.mxu0 0.0
        %1691 = vmatprep.subr.mxu0 0.0
        %1692 = vmatpush2.msra.mxu0 0.0
        %1693 = vmatprep.subr.mxu0 0.0
        %1694 = vmatpush2.msra.mxu0 0.0
        %1695 = vmatprep.mubr.f32.mxu0 0.0
        %v1696 = vand.u32 %v1286, 4294901760
        %1697 = vmatmul.mubr.f32.gmra.mxu0 %v1696
        %v1698 = vpop.f32.mrf.mxu0
        %v1699 = vadd.f32 %v1615, %v1698
        %v1700 = vpop.f32.mrf.mxu0
        %v1701 = vadd.f32 %v1617, %v1700
        %1702 = vdwg.mxu0
        %1703 = vmatprep.subr.mxu0 0.0
        %1704 = vmatpush1.msra.mxu0 0.0
        %1705 = vmatprep.subr.mxu0 0.0
        %1706 = vmatpush1.msra.mxu0 0.0
        %1707 = vmatprep.subr.mxu0 0.0
        %1708 = vmatpush1.msra.mxu0 0.0
        %1709 = vmatprep.subr.mxu0 0.0
        %1710 = vmatpush1.msra.mxu0 0.0
        %1711 = vmatprep.subr.mxu0 0.0
        %1712 = vmatpush1.msra.mxu0 0.0
        %1713 = vmatprep.subr.mxu0 0.0
        %1714 = vmatpush1.msra.mxu0 0.0
        %1715 = vmatprep.subr.mxu0 0.0
        %1716 = vmatpush1.msra.mxu0 0.0
        %1717 = vmatprep.subr.mxu0 0.0
        %1718 = vmatpush1.msra.mxu0 0.0
        %1719 = vmatprep.subr.mxu0 0.0
        %1720 = vmatpush1.msra.mxu0 0.0
        %1721 = vmatprep.subr.mxu0 0.0
        %1722 = vmatpush1.msra.mxu0 0.0
        %1723 = vmatprep.subr.mxu0 0.0
        %1724 = vmatpush1.msra.mxu0 0.0
        %1725 = vmatprep.subr.mxu0 0.0
        %1726 = vmatpush1.msra.mxu0 0.0
        %1727 = vmatprep.subr.mxu0 0.0
        %1728 = vmatpush1.msra.mxu0 0.0
        %1729 = vmatprep.subr.mxu0 0.0
        %1730 = vmatpush1.msra.mxu0 0.0
        %v1731 = vand.u32 %v1281, 4294901760
        %1732 = vmatprep.subr.mxu0 %v1731
        %v1733 = vand.u32 %v1280, 4294901760
        %1734 = vmatpush1.msra.mxu0 %v1733
        %v1735 = vand.u32 %v1213, 4294901760
        %1736 = vmatprep.subr.mxu0 %v1735
        %v1737 = vand.u32 %v1212, 4294901760
        %1738 = vmatpush1.msra.mxu0 %v1737
        %1739 = vmatprep.subr.mxu0 0.0
        %1740 = vmatpush2.msra.mxu0 0.0
        %1741 = vmatprep.subr.mxu0 0.0
        %1742 = vmatpush2.msra.mxu0 0.0
        %1743 = vmatprep.subr.mxu0 0.0
        %1744 = vmatpush2.msra.mxu0 0.0
        %1745 = vmatprep.subr.mxu0 0.0
        %1746 = vmatpush2.msra.mxu0 0.0
        %1747 = vmatprep.subr.mxu0 0.0
        %1748 = vmatpush2.msra.mxu0 0.0
        %1749 = vmatprep.subr.mxu0 0.0
        %1750 = vmatpush2.msra.mxu0 0.0
        %1751 = vmatprep.subr.mxu0 0.0
        %1752 = vmatpush2.msra.mxu0 0.0
        %1753 = vmatprep.subr.mxu0 0.0
        %1754 = vmatpush2.msra.mxu0 0.0
        %1755 = vmatprep.subr.mxu0 0.0
        %1756 = vmatpush2.msra.mxu0 0.0
        %1757 = vmatprep.subr.mxu0 0.0
        %1758 = vmatpush2.msra.mxu0 0.0
        %1759 = vmatprep.subr.mxu0 0.0
        %1760 = vmatpush2.msra.mxu0 0.0
        %1761 = vmatprep.subr.mxu0 0.0
        %1762 = vmatpush2.msra.mxu0 0.0
        %1763 = vmatprep.subr.mxu0 0.0
        %1764 = vmatpush2.msra.mxu0 0.0
        %1765 = vmatprep.subr.mxu0 0.0
        %1766 = vmatpush2.msra.mxu0 0.0
        %1767 = vmatprep.subr.mxu0 0.0
        %1768 = vmatpush2.msra.mxu0 0.0
        %1769 = vmatprep.subr.mxu0 0.0
        %1770 = vmatpush2.msra.mxu0 0.0
        %1771 = vmatprep.mubr.f32.mxu0 0.0
        %v1772 = vand.u32 %v1286, 4294901760
        %1773 = vmatmul.mubr.f32.gmra.mxu0 %v1772
        %v1774 = vpop.f32.mrf.mxu0
        %v1775 = vadd.f32 %v1699, %v1774
        %v1776 = vpop.f32.mrf.mxu0
        %v1777 = vadd.f32 %v1701, %v1776
        %1778 = vdwg.mxu0
        %1779 = vmatprep.subr.mxu0 0.0
        %1780 = vmatpush1.msra.mxu0 0.0
        %1781 = vmatprep.subr.mxu0 0.0
        %1782 = vmatpush1.msra.mxu0 0.0
        %1783 = vmatprep.subr.mxu0 0.0
        %1784 = vmatpush1.msra.mxu0 0.0
        %1785 = vmatprep.subr.mxu0 0.0
        %1786 = vmatpush1.msra.mxu0 0.0
        %1787 = vmatprep.subr.mxu0 0.0
        %1788 = vmatpush1.msra.mxu0 0.0
        %1789 = vmatprep.subr.mxu0 0.0
        %1790 = vmatpush1.msra.mxu0 0.0
        %1791 = vmatprep.subr.mxu0 0.0
        %1792 = vmatpush1.msra.mxu0 0.0
        %1793 = vmatprep.subr.mxu0 0.0
        %1794 = vmatpush1.msra.mxu0 0.0
        %1795 = vmatprep.subr.mxu0 0.0
        %1796 = vmatpush1.msra.mxu0 0.0
        %1797 = vmatprep.subr.mxu0 0.0
        %1798 = vmatpush1.msra.mxu0 0.0
        %1799 = vmatprep.subr.mxu0 0.0
        %1800 = vmatpush1.msra.mxu0 0.0
        %1801 = vmatprep.subr.mxu0 0.0
        %1802 = vmatpush1.msra.mxu0 0.0
        %1803 = vmatprep.subr.mxu0 0.0
        %1804 = vmatpush1.msra.mxu0 0.0
        %1805 = vmatprep.subr.mxu0 0.0
        %1806 = vmatpush1.msra.mxu0 0.0
        %v1807 = vand.u32 %v1283, 4294901760
        %1808 = vmatprep.subr.mxu0 %v1807
        %v1809 = vand.u32 %v1282, 4294901760
        %1810 = vmatpush1.msra.mxu0 %v1809
        %v1811 = vand.u32 %v1215, 4294901760
        %1812 = vmatprep.subr.mxu0 %v1811
        %v1813 = vand.u32 %v1214, 4294901760
        %1814 = vmatpush1.msra.mxu0 %v1813
        %1815 = vmatprep.subr.mxu0 0.0
        %1816 = vmatpush2.msra.mxu0 0.0
        %1817 = vmatprep.subr.mxu0 0.0
        %1818 = vmatpush2.msra.mxu0 0.0
        %1819 = vmatprep.subr.mxu0 0.0
        %1820 = vmatpush2.msra.mxu0 0.0
        %1821 = vmatprep.subr.mxu0 0.0
        %1822 = vmatpush2.msra.mxu0 0.0
        %1823 = vmatprep.subr.mxu0 0.0
        %1824 = vmatpush2.msra.mxu0 0.0
        %1825 = vmatprep.subr.mxu0 0.0
        %1826 = vmatpush2.msra.mxu0 0.0
        %1827 = vmatprep.subr.mxu0 0.0
        %1828 = vmatpush2.msra.mxu0 0.0
        %1829 = vmatprep.subr.mxu0 0.0
        %1830 = vmatpush2.msra.mxu0 0.0
        %1831 = vmatprep.subr.mxu0 0.0
        %1832 = vmatpush2.msra.mxu0 0.0
        %1833 = vmatprep.subr.mxu0 0.0
        %1834 = vmatpush2.msra.mxu0 0.0
        %1835 = vmatprep.subr.mxu0 0.0
        %1836 = vmatpush2.msra.mxu0 0.0
        %1837 = vmatprep.subr.mxu0 0.0
        %1838 = vmatpush2.msra.mxu0 0.0
        %1839 = vmatprep.subr.mxu0 0.0
        %1840 = vmatpush2.msra.mxu0 0.0
        %1841 = vmatprep.subr.mxu0 0.0
        %1842 = vmatpush2.msra.mxu0 0.0
        %1843 = vmatprep.subr.mxu0 0.0
        %1844 = vmatpush2.msra.mxu0 0.0
        %1845 = vmatprep.subr.mxu0 0.0
        %1846 = vmatpush2.msra.mxu0 0.0
        %1847 = vmatprep.mubr.f32.mxu0 0.0
        %v1848 = vand.u32 %v1286, 4294901760
        %v1849 = vsub.f32 %v1286, %v1848
        %v1850 = vand.u32 %v1849, 4294901760
        %v1851 = vsub.f32 %v1849, %v1850
        %v1852 = vand.u32 %v1851, 4294901760
        %1853 = vmatmul.mubr.f32.gmra.mxu0 %v1852
        %v1854 = vpop.f32.mrf.mxu0
        %v1855 = vadd.f32 0.0, %v1854
        %v1856 = vpop.f32.mrf.mxu0
        %v1857 = vadd.f32 0.0, %v1856
        %1858 = vdwg.mxu0
        %1859 = vmatprep.subr.mxu0 0.0
        %1860 = vmatpush1.msra.mxu0 0.0
        %1861 = vmatprep.subr.mxu0 0.0
        %1862 = vmatpush1.msra.mxu0 0.0
        %1863 = vmatprep.subr.mxu0 0.0
        %1864 = vmatpush1.msra.mxu0 0.0
        %1865 = vmatprep.subr.mxu0 0.0
        %1866 = vmatpush1.msra.mxu0 0.0
        %1867 = vmatprep.subr.mxu0 0.0
        %1868 = vmatpush1.msra.mxu0 0.0
        %1869 = vmatprep.subr.mxu0 0.0
        %1870 = vmatpush1.msra.mxu0 0.0
        %1871 = vmatprep.subr.mxu0 0.0
        %1872 = vmatpush1.msra.mxu0 0.0
        %1873 = vmatprep.subr.mxu0 0.0
        %1874 = vmatpush1.msra.mxu0 0.0
        %1875 = vmatprep.subr.mxu0 0.0
        %1876 = vmatpush1.msra.mxu0 0.0
        %1877 = vmatprep.subr.mxu0 0.0
        %1878 = vmatpush1.msra.mxu0 0.0
        %1879 = vmatprep.subr.mxu0 0.0
        %1880 = vmatpush1.msra.mxu0 0.0
        %1881 = vmatprep.subr.mxu0 0.0
        %1882 = vmatpush1.msra.mxu0 0.0
        %1883 = vmatprep.subr.mxu0 0.0
        %1884 = vmatpush1.msra.mxu0 0.0
        %1885 = vmatprep.subr.mxu0 0.0
        %1886 = vmatpush1.msra.mxu0 0.0
        %v1887 = vand.u32 %v1283, 4294901760
        %v1888 = vsub.f32 %v1283, %v1887
        %v1889 = vand.u32 %v1888, 4294901760
        %v1890 = vsub.f32 %v1888, %v1889
        %v1891 = vand.u32 %v1890, 4294901760
        %1892 = vmatprep.subr.mxu0 %v1891
        %v1893 = vand.u32 %v1282, 4294901760
        %v1894 = vsub.f32 %v1282, %v1893
        %v1895 = vand.u32 %v1894, 4294901760
        %v1896 = vsub.f32 %v1894, %v1895
        %v1897 = vand.u32 %v1896, 4294901760
        %1898 = vmatpush1.msra.mxu0 %v1897
        %v1899 = vand.u32 %v1215, 4294901760
        %v1900 = vsub.f32 %v1215, %v1899
        %v1901 = vand.u32 %v1900, 4294901760
        %v1902 = vsub.f32 %v1900, %v1901
        %v1903 = vand.u32 %v1902, 4294901760
        %1904 = vmatprep.subr.mxu0 %v1903
        %v1905 = vand.u32 %v1214, 4294901760
        %v1906 = vsub.f32 %v1214, %v1905
        %v1907 = vand.u32 %v1906, 4294901760
        %v1908 = vsub.f32 %v1906, %v1907
        %v1909 = vand.u32 %v1908, 4294901760
        %1910 = vmatpush1.msra.mxu0 %v1909
        %1911 = vmatprep.subr.mxu0 0.0
        %1912 = vmatpush2.msra.mxu0 0.0
        %1913 = vmatprep.subr.mxu0 0.0
        %1914 = vmatpush2.msra.mxu0 0.0
        %1915 = vmatprep.subr.mxu0 0.0
        %1916 = vmatpush2.msra.mxu0 0.0
        %1917 = vmatprep.subr.mxu0 0.0
        %1918 = vmatpush2.msra.mxu0 0.0
        %1919 = vmatprep.subr.mxu0 0.0
        %1920 = vmatpush2.msra.mxu0 0.0
        %1921 = vmatprep.subr.mxu0 0.0
        %1922 = vmatpush2.msra.mxu0 0.0
        %1923 = vmatprep.subr.mxu0 0.0
        %1924 = vmatpush2.msra.mxu0 0.0
        %1925 = vmatprep.subr.mxu0 0.0
        %1926 = vmatpush2.msra.mxu0 0.0
        %1927 = vmatprep.subr.mxu0 0.0
        %1928 = vmatpush2.msra.mxu0 0.0
        %1929 = vmatprep.subr.mxu0 0.0
        %1930 = vmatpush2.msra.mxu0 0.0
        %1931 = vmatprep.subr.mxu0 0.0
        %1932 = vmatpush2.msra.mxu0 0.0
        %1933 = vmatprep.subr.mxu0 0.0
        %1934 = vmatpush2.msra.mxu0 0.0
        %1935 = vmatprep.subr.mxu0 0.0
        %1936 = vmatpush2.msra.mxu0 0.0
        %1937 = vmatprep.subr.mxu0 0.0
        %1938 = vmatpush2.msra.mxu0 0.0
        %1939 = vmatprep.subr.mxu0 0.0
        %1940 = vmatpush2.msra.mxu0 0.0
        %1941 = vmatprep.subr.mxu0 0.0
        %1942 = vmatpush2.msra.mxu0 0.0
        %1943 = vmatprep.mubr.f32.mxu0 0.0
        %v1944 = vand.u32 %v1286, 4294901760
        %1945 = vmatmul.mubr.f32.gmra.mxu0 %v1944
        %v1946 = vpop.f32.mrf.mxu0
        %v1947 = vadd.f32 %v1855, %v1946
        %v1948 = vpop.f32.mrf.mxu0
        %v1949 = vadd.f32 %v1857, %v1948
        %1950 = vdwg.mxu0
        %1951 = vmatprep.subr.mxu0 0.0
        %1952 = vmatpush1.msra.mxu0 0.0
        %1953 = vmatprep.subr.mxu0 0.0
        %1954 = vmatpush1.msra.mxu0 0.0
        %1955 = vmatprep.subr.mxu0 0.0
        %1956 = vmatpush1.msra.mxu0 0.0
        %1957 = vmatprep.subr.mxu0 0.0
        %1958 = vmatpush1.msra.mxu0 0.0
        %1959 = vmatprep.subr.mxu0 0.0
        %1960 = vmatpush1.msra.mxu0 0.0
        %1961 = vmatprep.subr.mxu0 0.0
        %1962 = vmatpush1.msra.mxu0 0.0
        %1963 = vmatprep.subr.mxu0 0.0
        %1964 = vmatpush1.msra.mxu0 0.0
        %1965 = vmatprep.subr.mxu0 0.0
        %1966 = vmatpush1.msra.mxu0 0.0
        %1967 = vmatprep.subr.mxu0 0.0
        %1968 = vmatpush1.msra.mxu0 0.0
        %1969 = vmatprep.subr.mxu0 0.0
        %1970 = vmatpush1.msra.mxu0 0.0
        %1971 = vmatprep.subr.mxu0 0.0
        %1972 = vmatpush1.msra.mxu0 0.0
        %1973 = vmatprep.subr.mxu0 0.0
        %1974 = vmatpush1.msra.mxu0 0.0
        %1975 = vmatprep.subr.mxu0 0.0
        %1976 = vmatpush1.msra.mxu0 0.0
        %1977 = vmatprep.subr.mxu0 0.0
        %1978 = vmatpush1.msra.mxu0 0.0
        %v1979 = vand.u32 %v1283, 4294901760
        %v1980 = vsub.f32 %v1283, %v1979
        %1981 = vmatprep.subr.mxu0 %v1980
        %v1982 = vand.u32 %v1282, 4294901760
        %v1983 = vsub.f32 %v1282, %v1982
        %1984 = vmatpush1.msra.mxu0 %v1983
        %v1985 = vand.u32 %v1215, 4294901760
        %v1986 = vsub.f32 %v1215, %v1985
        %1987 = vmatprep.subr.mxu0 %v1986
        %v1988 = vand.u32 %v1214, 4294901760
        %v1989 = vsub.f32 %v1214, %v1988
        %1990 = vmatpush1.msra.mxu0 %v1989
        %1991 = vmatprep.subr.mxu0 0.0
        %1992 = vmatpush2.msra.mxu0 0.0
        %1993 = vmatprep.subr.mxu0 0.0
        %1994 = vmatpush2.msra.mxu0 0.0
        %1995 = vmatprep.subr.mxu0 0.0
        %1996 = vmatpush2.msra.mxu0 0.0
        %1997 = vmatprep.subr.mxu0 0.0
        %1998 = vmatpush2.msra.mxu0 0.0
        %1999 = vmatprep.subr.mxu0 0.0
        %2000 = vmatpush2.msra.mxu0 0.0
        %2001 = vmatprep.subr.mxu0 0.0
        %2002 = vmatpush2.msra.mxu0 0.0
        %2003 = vmatprep.subr.mxu0 0.0
        %2004 = vmatpush2.msra.mxu0 0.0
        %2005 = vmatprep.subr.mxu0 0.0
        %2006 = vmatpush2.msra.mxu0 0.0
        %2007 = vmatprep.subr.mxu0 0.0
        %2008 = vmatpush2.msra.mxu0 0.0
        %2009 = vmatprep.subr.mxu0 0.0
        %2010 = vmatpush2.msra.mxu0 0.0
        %2011 = vmatprep.subr.mxu0 0.0
        %2012 = vmatpush2.msra.mxu0 0.0
        %2013 = vmatprep.subr.mxu0 0.0
        %2014 = vmatpush2.msra.mxu0 0.0
        %2015 = vmatprep.subr.mxu0 0.0
        %2016 = vmatpush2.msra.mxu0 0.0
        %2017 = vmatprep.subr.mxu0 0.0
        %2018 = vmatpush2.msra.mxu0 0.0
        %2019 = vmatprep.subr.mxu0 0.0
        %2020 = vmatpush2.msra.mxu0 0.0
        %2021 = vmatprep.subr.mxu0 0.0
        %2022 = vmatpush2.msra.mxu0 0.0
        %2023 = vmatprep.mubr.f32.mxu0 0.0
        %v2024 = vand.u32 %v1286, 4294901760
        %v2025 = vsub.f32 %v1286, %v2024
        %2026 = vmatmul.mubr.f32.gmra.mxu0 %v2025
        %v2027 = vpop.f32.mrf.mxu0
        %v2028 = vadd.f32 %v1947, %v2027
        %v2029 = vpop.f32.mrf.mxu0
        %v2030 = vadd.f32 %v1949, %v2029
        %2031 = vdwg.mxu0
        %2032 = vmatprep.subr.mxu0 0.0
        %2033 = vmatpush1.msra.mxu0 0.0
        %2034 = vmatprep.subr.mxu0 0.0
        %2035 = vmatpush1.msra.mxu0 0.0
        %2036 = vmatprep.subr.mxu0 0.0
        %2037 = vmatpush1.msra.mxu0 0.0
        %2038 = vmatprep.subr.mxu0 0.0
        %2039 = vmatpush1.msra.mxu0 0.0
        %2040 = vmatprep.subr.mxu0 0.0
        %2041 = vmatpush1.msra.mxu0 0.0
        %2042 = vmatprep.subr.mxu0 0.0
        %2043 = vmatpush1.msra.mxu0 0.0
        %2044 = vmatprep.subr.mxu0 0.0
        %2045 = vmatpush1.msra.mxu0 0.0
        %2046 = vmatprep.subr.mxu0 0.0
        %2047 = vmatpush1.msra.mxu0 0.0
        %2048 = vmatprep.subr.mxu0 0.0
        %2049 = vmatpush1.msra.mxu0 0.0
        %2050 = vmatprep.subr.mxu0 0.0
        %2051 = vmatpush1.msra.mxu0 0.0
        %2052 = vmatprep.subr.mxu0 0.0
        %2053 = vmatpush1.msra.mxu0 0.0
        %2054 = vmatprep.subr.mxu0 0.0
        %2055 = vmatpush1.msra.mxu0 0.0
        %2056 = vmatprep.subr.mxu0 0.0
        %2057 = vmatpush1.msra.mxu0 0.0
        %2058 = vmatprep.subr.mxu0 0.0
        %2059 = vmatpush1.msra.mxu0 0.0
        %v2060 = vand.u32 %v1283, 4294901760
        %2061 = vmatprep.subr.mxu0 %v2060
        %v2062 = vand.u32 %v1282, 4294901760
        %2063 = vmatpush1.msra.mxu0 %v2062
        %v2064 = vand.u32 %v1215, 4294901760
        %2065 = vmatprep.subr.mxu0 %v2064
        %v2066 = vand.u32 %v1214, 4294901760
        %2067 = vmatpush1.msra.mxu0 %v2066
        %2068 = vmatprep.subr.mxu0 0.0
        %2069 = vmatpush2.msra.mxu0 0.0
        %2070 = vmatprep.subr.mxu0 0.0
        %2071 = vmatpush2.msra.mxu0 0.0
        %2072 = vmatprep.subr.mxu0 0.0
        %2073 = vmatpush2.msra.mxu0 0.0
        %2074 = vmatprep.subr.mxu0 0.0
        %2075 = vmatpush2.msra.mxu0 0.0
        %2076 = vmatprep.subr.mxu0 0.0
        %2077 = vmatpush2.msra.mxu0 0.0
        %2078 = vmatprep.subr.mxu0 0.0
        %2079 = vmatpush2.msra.mxu0 0.0
        %2080 = vmatprep.subr.mxu0 0.0
        %2081 = vmatpush2.msra.mxu0 0.0
        %2082 = vmatprep.subr.mxu0 0.0
        %2083 = vmatpush2.msra.mxu0 0.0
        %2084 = vmatprep.subr.mxu0 0.0
        %2085 = vmatpush2.msra.mxu0 0.0
        %2086 = vmatprep.subr.mxu0 0.0
        %2087 = vmatpush2.msra.mxu0 0.0
        %2088 = vmatprep.subr.mxu0 0.0
        %2089 = vmatpush2.msra.mxu0 0.0
        %2090 = vmatprep.subr.mxu0 0.0
        %2091 = vmatpush2.msra.mxu0 0.0
        %2092 = vmatprep.subr.mxu0 0.0
        %2093 = vmatpush2.msra.mxu0 0.0
        %2094 = vmatprep.subr.mxu0 0.0
        %2095 = vmatpush2.msra.mxu0 0.0
        %2096 = vmatprep.subr.mxu0 0.0
        %2097 = vmatpush2.msra.mxu0 0.0
        %2098 = vmatprep.subr.mxu0 0.0
        %2099 = vmatpush2.msra.mxu0 0.0
        %2100 = vmatprep.mubr.f32.mxu0 0.0
        %v2101 = vand.u32 %v1286, 4294901760
        %v2102 = vsub.f32 %v1286, %v2101
        %v2103 = vand.u32 %v2102, 4294901760
        %2104 = vmatmul.mubr.f32.gmra.mxu0 %v2103
        %v2105 = vpop.f32.mrf.mxu0
        %v2106 = vadd.f32 %v2028, %v2105
        %v2107 = vpop.f32.mrf.mxu0
        %v2108 = vadd.f32 %v2030, %v2107
        %2109 = vdwg.mxu0
        %2110 = vmatprep.subr.mxu0 0.0
        %2111 = vmatpush1.msra.mxu0 0.0
        %2112 = vmatprep.subr.mxu0 0.0
        %2113 = vmatpush1.msra.mxu0 0.0
        %2114 = vmatprep.subr.mxu0 0.0
        %2115 = vmatpush1.msra.mxu0 0.0
        %2116 = vmatprep.subr.mxu0 0.0
        %2117 = vmatpush1.msra.mxu0 0.0
        %2118 = vmatprep.subr.mxu0 0.0
        %2119 = vmatpush1.msra.mxu0 0.0
        %2120 = vmatprep.subr.mxu0 0.0
        %2121 = vmatpush1.msra.mxu0 0.0
        %2122 = vmatprep.subr.mxu0 0.0
        %2123 = vmatpush1.msra.mxu0 0.0
        %2124 = vmatprep.subr.mxu0 0.0
        %2125 = vmatpush1.msra.mxu0 0.0
        %2126 = vmatprep.subr.mxu0 0.0
        %2127 = vmatpush1.msra.mxu0 0.0
        %2128 = vmatprep.subr.mxu0 0.0
        %2129 = vmatpush1.msra.mxu0 0.0
        %2130 = vmatprep.subr.mxu0 0.0
        %2131 = vmatpush1.msra.mxu0 0.0
        %2132 = vmatprep.subr.mxu0 0.0
        %2133 = vmatpush1.msra.mxu0 0.0
        %2134 = vmatprep.subr.mxu0 0.0
        %2135 = vmatpush1.msra.mxu0 0.0
        %2136 = vmatprep.subr.mxu0 0.0
        %2137 = vmatpush1.msra.mxu0 0.0
        %v2138 = vand.u32 %v1283, 4294901760
        %v2139 = vsub.f32 %v1283, %v2138
        %v2140 = vand.u32 %v2139, 4294901760
        %2141 = vmatprep.subr.mxu0 %v2140
        %v2142 = vand.u32 %v1282, 4294901760
        %v2143 = vsub.f32 %v1282, %v2142
        %v2144 = vand.u32 %v2143, 4294901760
        %2145 = vmatpush1.msra.mxu0 %v2144
        %v2146 = vand.u32 %v1215, 4294901760
        %v2147 = vsub.f32 %v1215, %v2146
        %v2148 = vand.u32 %v2147, 4294901760
        %2149 = vmatprep.subr.mxu0 %v2148
        %v2150 = vand.u32 %v1214, 4294901760
        %v2151 = vsub.f32 %v1214, %v2150
        %v2152 = vand.u32 %v2151, 4294901760
        %2153 = vmatpush1.msra.mxu0 %v2152
        %2154 = vmatprep.subr.mxu0 0.0
        %2155 = vmatpush2.msra.mxu0 0.0
        %2156 = vmatprep.subr.mxu0 0.0
        %2157 = vmatpush2.msra.mxu0 0.0
        %2158 = vmatprep.subr.mxu0 0.0
        %2159 = vmatpush2.msra.mxu0 0.0
        %2160 = vmatprep.subr.mxu0 0.0
        %2161 = vmatpush2.msra.mxu0 0.0
        %2162 = vmatprep.subr.mxu0 0.0
        %2163 = vmatpush2.msra.mxu0 0.0
        %2164 = vmatprep.subr.mxu0 0.0
        %2165 = vmatpush2.msra.mxu0 0.0
        %2166 = vmatprep.subr.mxu0 0.0
        %2167 = vmatpush2.msra.mxu0 0.0
        %2168 = vmatprep.subr.mxu0 0.0
        %2169 = vmatpush2.msra.mxu0 0.0
        %2170 = vmatprep.subr.mxu0 0.0
        %2171 = vmatpush2.msra.mxu0 0.0
        %2172 = vmatprep.subr.mxu0 0.0
        %2173 = vmatpush2.msra.mxu0 0.0
        %2174 = vmatprep.subr.mxu0 0.0
        %2175 = vmatpush2.msra.mxu0 0.0
        %2176 = vmatprep.subr.mxu0 0.0
        %2177 = vmatpush2.msra.mxu0 0.0
        %2178 = vmatprep.subr.mxu0 0.0
        %2179 = vmatpush2.msra.mxu0 0.0
        %2180 = vmatprep.subr.mxu0 0.0
        %2181 = vmatpush2.msra.mxu0 0.0
        %2182 = vmatprep.subr.mxu0 0.0
        %2183 = vmatpush2.msra.mxu0 0.0
        %2184 = vmatprep.subr.mxu0 0.0
        %2185 = vmatpush2.msra.mxu0 0.0
        %2186 = vmatprep.mubr.f32.mxu0 0.0
        %v2187 = vand.u32 %v1286, 4294901760
        %2188 = vmatmul.mubr.f32.gmra.mxu0 %v2187
        %v2189 = vpop.f32.mrf.mxu0
        %v2190 = vadd.f32 %v2106, %v2189
        %v2191 = vpop.f32.mrf.mxu0
        %v2192 = vadd.f32 %v2108, %v2191
        %2193 = vdwg.mxu0
        %2194 = vmatprep.subr.mxu0 0.0
        %2195 = vmatpush1.msra.mxu0 0.0
        %2196 = vmatprep.subr.mxu0 0.0
        %2197 = vmatpush1.msra.mxu0 0.0
        %2198 = vmatprep.subr.mxu0 0.0
        %2199 = vmatpush1.msra.mxu0 0.0
        %2200 = vmatprep.subr.mxu0 0.0
        %2201 = vmatpush1.msra.mxu0 0.0
        %2202 = vmatprep.subr.mxu0 0.0
        %2203 = vmatpush1.msra.mxu0 0.0
        %2204 = vmatprep.subr.mxu0 0.0
        %2205 = vmatpush1.msra.mxu0 0.0
        %2206 = vmatprep.subr.mxu0 0.0
        %2207 = vmatpush1.msra.mxu0 0.0
        %2208 = vmatprep.subr.mxu0 0.0
        %2209 = vmatpush1.msra.mxu0 0.0
        %2210 = vmatprep.subr.mxu0 0.0
        %2211 = vmatpush1.msra.mxu0 0.0
        %2212 = vmatprep.subr.mxu0 0.0
        %2213 = vmatpush1.msra.mxu0 0.0
        %2214 = vmatprep.subr.mxu0 0.0
        %2215 = vmatpush1.msra.mxu0 0.0
        %2216 = vmatprep.subr.mxu0 0.0
        %2217 = vmatpush1.msra.mxu0 0.0
        %2218 = vmatprep.subr.mxu0 0.0
        %2219 = vmatpush1.msra.mxu0 0.0
        %2220 = vmatprep.subr.mxu0 0.0
        %2221 = vmatpush1.msra.mxu0 0.0
        %v2222 = vand.u32 %v1283, 4294901760
        %2223 = vmatprep.subr.mxu0 %v2222
        %v2224 = vand.u32 %v1282, 4294901760
        %2225 = vmatpush1.msra.mxu0 %v2224
        %v2226 = vand.u32 %v1215, 4294901760
        %2227 = vmatprep.subr.mxu0 %v2226
        %v2228 = vand.u32 %v1214, 4294901760
        %2229 = vmatpush1.msra.mxu0 %v2228
        %2230 = vmatprep.subr.mxu0 0.0
        %2231 = vmatpush2.msra.mxu0 0.0
        %2232 = vmatprep.subr.mxu0 0.0
        %2233 = vmatpush2.msra.mxu0 0.0
        %2234 = vmatprep.subr.mxu0 0.0
        %2235 = vmatpush2.msra.mxu0 0.0
        %2236 = vmatprep.subr.mxu0 0.0
        %2237 = vmatpush2.msra.mxu0 0.0
        %2238 = vmatprep.subr.mxu0 0.0
        %2239 = vmatpush2.msra.mxu0 0.0
        %2240 = vmatprep.subr.mxu0 0.0
        %2241 = vmatpush2.msra.mxu0 0.0
        %2242 = vmatprep.subr.mxu0 0.0
        %2243 = vmatpush2.msra.mxu0 0.0
        %2244 = vmatprep.subr.mxu0 0.0
        %2245 = vmatpush2.msra.mxu0 0.0
        %2246 = vmatprep.subr.mxu0 0.0
        %2247 = vmatpush2.msra.mxu0 0.0
        %2248 = vmatprep.subr.mxu0 0.0
        %2249 = vmatpush2.msra.mxu0 0.0
        %2250 = vmatprep.subr.mxu0 0.0
        %2251 = vmatpush2.msra.mxu0 0.0
        %2252 = vmatprep.subr.mxu0 0.0
        %2253 = vmatpush2.msra.mxu0 0.0
        %2254 = vmatprep.subr.mxu0 0.0
        %2255 = vmatpush2.msra.mxu0 0.0
        %2256 = vmatprep.subr.mxu0 0.0
        %2257 = vmatpush2.msra.mxu0 0.0
        %2258 = vmatprep.subr.mxu0 0.0
        %2259 = vmatpush2.msra.mxu0 0.0
        %2260 = vmatprep.subr.mxu0 0.0
        %2261 = vmatpush2.msra.mxu0 0.0
        %2262 = vmatprep.mubr.f32.mxu0 0.0
        %v2263 = vand.u32 %v1286, 4294901760
        %2264 = vmatmul.mubr.f32.gmra.mxu0 %v2263
        %v2265 = vpop.f32.mrf.mxu0
        %v2266 = vadd.f32 %v2190, %v2265
        %v2267 = vpop.f32.mrf.mxu0
        %v2268 = vadd.f32 %v2192, %v2267
        %2269 = vdwg.mxu0
        %v2270 = vcombine.low %v1775, %v2266
        %v2271 = vcombine.high %v1775, %v2266
        %v2273 = vunpack.c.l.s4 1983009808
        %v2274 = vunpack.c.0.s8 %v2273
        %v2275 = vlaneseq
        %v2276 = vshrl.u32 %v2275, 7
        %v2277 = vsub.s32 %v2274, %v2276
        %v2278 = vrot.slane %v2270, %v2277
        %v2280 = vunpack.c.l.s4 1983009808
        %v2281 = vunpack.c.0.s8 %v2280
        %v2282 = vlaneseq
        %v2283 = vshrl.u32 %v2282, 7
        %v2284 = vsub.s32 %v2281, %v2283
        %v2285 = vrot.slane %v2271, %v2284
        %v2286 = vcombine.low %v1777, %v2268
        %v2287 = vcombine.high %v1777, %v2268
        %v2289 = vunpack.c.l.s4 1983009808
        %v2290 = vunpack.c.0.s8 %v2289
        %v2291 = vlaneseq
        %v2292 = vshrl.u32 %v2291, 7
        %v2293 = vsub.s32 %v2290, %v2292
        %v2294 = vrot.slane %v2286, %v2293
        %v2296 = vunpack.c.l.s4 1983009808
        %v2297 = vunpack.c.0.s8 %v2296
        %v2298 = vlaneseq
        %v2299 = vshrl.u32 %v2298, 7
        %v2300 = vsub.s32 %v2297, %v2299
        %v2301 = vrot.slane %v2287, %v2300
        %v2302 = vcombine.low %v2278, %v2294
        %v2303 = vcombine.high %v2278, %v2294
        %v2305 = vunpack.c.l.s4 1934713408
        %v2306 = vunpack.c.0.s8 %v2305
        %v2307 = vlaneseq
        %v2308 = vshrl.u32 %v2307, 7
        %v2309 = vsub.s32 %v2306, %v2308
        %v2310 = vrot.slane %v2302, %v2309
        %v2312 = vunpack.c.l.s4 1934713408
        %v2313 = vunpack.c.0.s8 %v2312
        %v2314 = vlaneseq
        %v2315 = vshrl.u32 %v2314, 7
        %v2316 = vsub.s32 %v2313, %v2315
        %v2317 = vrot.slane %v2303, %v2316
        %v2318 = vcombine.low %v2285, %v2301
        %v2319 = vcombine.high %v2285, %v2301
        %v2321 = vunpack.c.l.s4 1934713408
        %v2322 = vunpack.c.0.s8 %v2321
        %v2323 = vlaneseq
        %v2324 = vshrl.u32 %v2323, 7
        %v2325 = vsub.s32 %v2322, %v2324
        %v2326 = vrot.slane %v2318, %v2325
        %v2328 = vunpack.c.l.s4 1934713408
        %v2329 = vunpack.c.0.s8 %v2328
        %v2330 = vlaneseq
        %v2331 = vshrl.u32 %v2330, 7
        %v2332 = vsub.s32 %v2329, %v2331
        %v2333 = vrot.slane %v2319, %v2332
        %v2334 = vcombine.high %v2310, 0.0
        %v2335 = vcombine.high %v2317, 0.0
        %v2336 = vcombine.high %v2326, 0.0
        %v2337 = vcombine.high %v2333, 0.0
        %v2338 = vcombine.low %v2310, %v2317
        %v2340 = vunpack.c.l.s4 1983009808
        %v2341 = vunpack.c.0.s8 %v2340
        %v2342 = vlaneseq
        %v2343 = vshrl.u32 %v2342, 7
        %v2344 = vsub.s32 %v2341, %v2343
        %v2345 = vrot.slane %v2338, %v2344
        %v2346 = vcombine.low %v2334, %v2335
        %v2348 = vunpack.c.l.s4 1983009808
        %v2349 = vunpack.c.0.s8 %v2348
        %v2350 = vlaneseq
        %v2351 = vshrl.u32 %v2350, 7
        %v2352 = vsub.s32 %v2349, %v2351
        %v2353 = vrot.slane %v2346, %v2352
        %v2354 = vcombine.low %v2326, %v2333
        %v2356 = vunpack.c.l.s4 1983009808
        %v2357 = vunpack.c.0.s8 %v2356
        %v2358 = vlaneseq
        %v2359 = vshrl.u32 %v2358, 7
        %v2360 = vsub.s32 %v2357, %v2359
        %v2361 = vrot.slane %v2354, %v2360
        %v2362 = vcombine.low %v2336, %v2337
        %v2364 = vunpack.c.l.s4 1983009808
        %v2365 = vunpack.c.0.s8 %v2364
        %v2366 = vlaneseq
        %v2367 = vshrl.u32 %v2366, 7
        %v2368 = vsub.s32 %v2365, %v2367
        %v2369 = vrot.slane %v2362, %v2368
        %v2370 = vcombine.low %v2345, %v2353
        %v2371 = vcombine.high %v2345, %v2353
        %v2373 = vunpack.c.l.s4 1934713408
        %v2374 = vunpack.c.0.s8 %v2373
        %v2375 = vlaneseq
        %v2376 = vshrl.u32 %v2375, 7
        %v2377 = vsub.s32 %v2374, %v2376
        %v2378 = vrot.slane %v2370, %v2377
        %v2380 = vunpack.c.l.s4 1934713408
        %v2381 = vunpack.c.0.s8 %v2380
        %v2382 = vlaneseq
        %v2383 = vshrl.u32 %v2382, 7
        %v2384 = vsub.s32 %v2381, %v2383
        %v2385 = vrot.slane %v2371, %v2384
        %v2386 = vcombine.low %v2361, %v2369
        %v2387 = vcombine.high %v2361, %v2369
        %v2389 = vunpack.c.l.s4 1934713408
        %v2390 = vunpack.c.0.s8 %v2389
        %v2391 = vlaneseq
        %v2392 = vshrl.u32 %v2391, 7
        %v2393 = vsub.s32 %v2390, %v2392
        %v2394 = vrot.slane %v2386, %v2393
        %v2396 = vunpack.c.l.s4 1934713408
        %v2397 = vunpack.c.0.s8 %v2396
        %v2398 = vlaneseq
        %v2399 = vshrl.u32 %v2398, 7
        %v2400 = vsub.s32 %v2397, %v2399
        %v2401 = vrot.slane %v2387, %v2400
        %v2402 = vcombine.low %v2378, %v2394
        %v2403 = vcombine.high %v2378, %v2394
        %v2404 = vcombine.low %v2385, %v2401
        %v2405 = vcombine.high %v2385, %v2401
        %2406 = vst [vmem:[%s214] sm:$0xff] %v2402
        %2407 = vst [vmem:[%s214 + $0x8] sm:$0xff] %v2403
        %2408 = vst [vmem:[%s214 + $0x10] sm:$0xff] %v2404
        %2409 = vst [vmem:[%s214 + $0x18] sm:$0xff] %v2405
        %s2410 = sand.u32 %s95, 1
        %s2411 = scalar_lea.sflag [#allocation4], %s2410
        %s2412 = sand.u32 %s95, 1
        %s2413 = smul.addr %s2412, 32
        %s2414 = scalar_lea.vmem [#allocation8], %s2413
        // Predicated region
        $region45: #{_lambda_.1} parent=31 // pred_check
          %p2415 = pneg %p105
        $region46: #{_lambda_.1} parent=31 // pred_check_branch
          %2417 = sbr.rel (%p2415) target = $region48
        $region47: #{_lambda_.1} parent=31 // pred_region
          %s2418 = smul.u32 4, %s19
          %s2420 = ssub.s32 512, 512
          %2421 = vsyncadd %s2411, %s2420
          %s2422 = smul.addr %s2418, 128
          %s2423 = scalar_lea.hbm %s3, %s2422
          %s2424 = sshll.u32 %s2414, 4
          %s2425 = int_to_ptr.vmem [resolvable:$true] %s2424
          %2430 = dma.vmem_to_hbm [thread:$0]  %s2425, 512, %s2423, %s2411, 128, 128, 8
        $region48: #{_lambda_.1} parent=31 // pred_fallthru
          _
      $region32: #{_lambda_.1} parent=5 // pred_fallthru
        _
      %p2431 = scmp.le.s32.totalorder 2, %s14
      // Predicated region
      $region49: #{_lambda_.1} parent=5 // pred_check
        %p2432 = pneg %p2431
      $region50: #{_lambda_.1} parent=5 // pred_check_branch
        %2434 = sbr.rel (%p2432) target = $region52
      $region51: #{_lambda_.1} parent=5 // pred_region
        %s2435 = ssub.s32 %s14, 2
        // Predicated region
        $region53: #{_lambda_.1} parent=51 // pred_check
          %p2436 = pneg %p111
        $region54: #{_lambda_.1} parent=51 // pred_check_branch
          %2438 = sbr.rel (%p2436) target = $region56
        $region55: #{_lambda_.1} parent=51 // pred_region
          %s2439 = sand.u32 %s96, 1
          %s2440 = scalar_lea.sflag [#allocation4], %s2439
          %s2441 = sand.u32 %s96, 1
          %s2442 = smul.addr %s2441, 32
          %s2443 = scalar_lea.vmem [#allocation8], %s2442
          %2444 = dma.done %s2440, 512
        $region56: #{_lambda_.1} parent=51 // pred_fallthru
          _
      $region52: #{_lambda_.1} parent=5 // pred_fallthru
        _
    $region6: #{_lambda_.1} parent=1 // loop_footer
      %s18 = sadd.s32 1, %s14
    $region7: #{_lambda_.1} parent=1 // loop_footer_branch
      %13 = sbr.rel target = $region3
    $region8: #{_lambda_.1} parent=1 // loop_exit
      _
    %2445 = vsyncpa [#allocation3], 1
    %s2446 = scalar_lea.sflag [#allocation3], 1
    %2447 = vsyncpa %s2446, 1
    %2448 = vsyncpa [#allocation6], 1
    %2449 = vsyncpa [#allocation4], 1
    %s2450 = scalar_lea.sflag [#allocation4], 1
    %2451 = vsyncpa %s2450, 1

</llo_original>
